<compile_context>
chip_gen: v5e
topology: v5e:2x2
jax: 0.10.0
libtpu: 0.0.40
codegen_flags: <defaults>
</compile_context>

<pallas_src>
import functools

import jax
import jax.numpy as jnp
from jax.experimental import pallas as pl
from jax.experimental.pallas import tpu as pltpu


def _sab_kernel(H, W, K, TB, wm_ref, x_ref, o_ref):
    """wm_ref: (K*K, 2*TB, H*W) stacked masked tap weights.
    x_ref/o_ref: (TB, C, H*W), lane-dense."""
    HW = H * W
    P = K // 2

    x = x_ref[...]                                 # native dtype, lane-dense
    xf = x.astype(jnp.float32)                     # dead after the reductions
    # Channel stats stacked along sublanes: rows [0,TB) = channel sum (1/C is
    # folded into the mean-tap weights), rows [TB,2TB) = channel max.
    s = jnp.concatenate(
        [jnp.sum(xf, axis=1), jnp.max(xf, axis=1)], axis=0)   # (2*TB, HW)

    # 7x7 zero-padded "same" conv: one lane roll per tap (XLU slot) serves both
    # stat channels; per-tap weights (zero-pad validity mask x conv weight,
    # pre-laid-out to the stacked sublane layout) arrive as one aligned VMEM
    # load.  Two partial accumulators keep the VALU adds independent.
    acc0 = jnp.zeros_like(s)
    acc1 = jnp.zeros_like(s)
    t = 0
    for kh in range(K):
        for kw in range(K):
            d = (kh - P) * W + (kw - P)            # flat tap offset
            sh = (-d) % HW                         # rolled[i] = s[i + d]
            r = pltpu.roll(s, sh, 1) if sh else s
            term = r * wm_ref[t]                   # (2*TB, HW), no broadcast
            if t % 2 == 0:
                acc0 = acc0 + term
            else:
                acc1 = acc1 + term
            t += 1
    acc = acc0 + acc1                              # (2*TB, HW)
    conv = acc[:TB, :] + acc[TB:, :]               # fold the two stat channels

    gate = jax.nn.sigmoid(conv).astype(o_ref.dtype)          # (TB, HW)
    # Gating multiply in the input dtype; re-read x_ref so no f32 copy of the
    # block stayed live across the tap loop.
    o_ref[...] = x_ref[...] * gate[:, None, :]


def _pick_tb(B, C, HW, KK, elem_bytes, vmem_budget_bytes):
    """Batch-tile size against an explicit VMEM budget + grid-shape heuristics."""
    per_b_io = C * HW * elem_bytes                 # one batch element (in == out)
    # f32 in-kernel temps per batch element: stacked stats (2 rows) + rolled
    # tap (2) + two partial accumulators (4) + gate (1) + channel-upcast slab.
    temps_per_b = (2 + 2 + 4 + 1) * HW * 4 + C * HW * 4
    table_per_tb = KK * 2 * HW * 4                 # stacked weight rows per TB
    denom = 4 * per_b_io + temps_per_b + 2 * table_per_tb   # 2x: double-buffers
    tb_fit = max(1, int(vmem_budget_bytes) // int(denom))
    # >=2 grid steps (two v7x TensorCores on the "parallel" axis), >=4 when B
    # allows so the BlockSpec pipeline can prefetch/writeback under compute.
    if B >= 4:
        tb_steps_cap = -(-B // 4)
    elif B >= 2:
        tb_steps_cap = -(-B // 2)
    else:
        tb_steps_cap = 1
    tb = max(1, min(B, tb_fit, tb_steps_cap))
    if tb >= 8:
        tb = (tb // 8) * 8                         # full f32 sublane groups
    return tb


def sab_pallas(x, conv_w, kernel_size=7, *, vmem_budget_bytes=40 * 1024 * 1024):
    """x: (B, C, H, W); conv_w: (1, 2, K, K) float32 (OIHW, bias=False)."""
    B, C, H, W = x.shape
    K = kernel_size
    P = K // 2
    HW = H * W
    KK = K * K

    TB = _pick_tb(B, C, HW, KK, max(int(x.dtype.itemsize), 1), vmem_budget_bytes)
    grid = (pl.cdiv(B, TB),)

    # Per-tap masked weights, pre-expanded to the kernel's stacked sublane
    # layout: rows [0,TB) carry mask * (w_mean / C), rows [TB,2TB) carry
    # mask * w_max, for each of the K*K taps.
    idx = jnp.arange(HW, dtype=jnp.int32)
    row = idx // W
    col = idx % W
    w = conv_w.reshape(2, KK).astype(jnp.float32)            # [mean_ch, max_ch]
    taps = []
    t = 0
    for kh in range(K):
        for kw in range(K):
            dh = kh - P
            dw = kw - P
            valid = ((row + dh >= 0) & (row + dh < H) &
                     (col + dw >= 0) & (col + dw < W)).astype(jnp.float32)
            w_mean = valid * (w[0, t] / float(C))            # (HW,)
            w_max = valid * w[1, t]                          # (HW,)
            taps.append(jnp.concatenate(
                [jnp.broadcast_to(w_mean, (TB, HW)),
                 jnp.broadcast_to(w_max, (TB, HW))], axis=0))
            t += 1
    wm = jnp.stack(taps, axis=0)                             # (KK, 2*TB, HW)

    # Lane-dense layout: flatten spatial dims into the lane axis (free for
    # contiguous NCHW).
    x_flat = x.reshape(B, C, HW)

    kern = functools.partial(_sab_kernel, H, W, K, TB)
    out_flat = pl.pallas_call(
        kern,
        out_shape=jax.ShapeDtypeStruct((B, C, HW), x.dtype),
        grid_spec=pltpu.PrefetchScalarGridSpec(
            num_scalar_prefetch=0,
            grid=grid,
            in_specs=[
                # stacked tap weights: constant block -> resident across steps
                pl.BlockSpec((KK, 2 * TB, HW), lambda b: (0, 0, 0)),
                # TB batch elements per step, lane-dense (C, H*W) slabs
                pl.BlockSpec((TB, C, HW), lambda b: (b, 0, 0)),
            ],
            out_specs=pl.BlockSpec((TB, C, HW), lambda b: (b, 0, 0)),
        ),
        compiler_params=pltpu.CompilerParams(
            dimension_semantics=("parallel",),       # batch elems independent
            vmem_limit_bytes=vmem_budget_bytes + (16 << 20),  # <= 64 MiB on v7x
        ),
    )(wm, x_flat)
    return out_flat.reshape(B, C, H, W)


def sab_reference(x, conv_w, kernel_size=7):
    P = kernel_size // 2
    avg = jnp.mean(x, axis=1, keepdims=True)
    mx = jnp.max(x, axis=1, keepdims=True)
    s = jnp.concatenate([avg, mx], axis=1)
    conv = jax.lax.conv_general_dilated(
        s, conv_w, window_strides=(1, 1),
        padding=[(P, P), (P, P)],
        dimension_numbers=("NCHW", "OIHW", "NCHW"))
    return jax.nn.sigmoid(conv) * x


if __name__ == "__main__":
    key = jax.random.PRNGKey(0)
    kx, kw = jax.random.split(key)

    B, C, H, W = 2, 4, 16, 16
    K = 7

    x = jax.random.normal(kx, (B, C, H, W), dtype=jnp.float32)
    # SAB.init_weights('normal'): nn.init.normal_(weight, std=0.02), bias=False
    conv_w = 0.02 * jax.random.normal(kw, (1, 2, K, K), dtype=jnp.float32)

    out = jax.block_until_ready(sab_pallas(x, conv_w, K))

    ref = sab_reference(x, conv_w, K)
    assert out.shape == (B, C, H, W)
    assert jnp.allclose(out, ref, atol=1e-5, rtol=1e-5), float(
        jnp.max(jnp.abs(out - ref)))

    # TODO(synk): the rest of DPARNet (ResNet-50/Swin encoders, RF/MLF/CAB/AG/
    # PARF/CU decoder blocks) is a full network and is not translated here.
    print("KERNEL_OK")
</pallas_src>

<mosaic_0001>
module attributes {stable_mosaic.version = 11 : i64} {
  func.func @_sab_kernel(%arg0: i32, %arg1: memref<49x2x256xf32, #tpu.memory_space<vmem>>, %arg2: memref<1x4x256xf32, #tpu.memory_space<vmem>>, %arg3: memref<1x4x256xf32, #tpu.memory_space<vmem>>) attributes {dimension_semantics = [#tpu.dimension_semantics<parallel>], iteration_bounds = array<i64: 2>, scalar_prefetch = 0 : i64, scratch_operands = 0 : i64, tpu.core_type = #tpu.core_type<tc>, window_params = [{pipeline_mode = #tpu.pipeline_mode<synchronous>, transform_indices = @transform_0, window_bounds = array<i64: 49, 2, 256>}, {transform_indices = @transform_1, window_bounds = array<i64: 1, 4, 256>}, {transform_indices = @transform_2, window_bounds = array<i64: 1, 4, 256>}]} {
    %c0 = arith.constant 0 : index
    %c0_0 = arith.constant 0 : index
    %c0_1 = arith.constant 0 : index
    %0 = vector.load %arg2[%c0, %c0_0, %c0_1] : memref<1x4x256xf32, #tpu.memory_space<vmem>>, vector<1x4x256xf32>
    %cst = arith.constant dense<0.000000e+00> : vector<1x256xf32>
    %1 = vector.multi_reduction <add>, %0, %cst [1] : vector<1x4x256xf32> to vector<1x256xf32>
    %cst_2 = arith.constant dense<0xFF800000> : vector<1x256xf32>
    %2 = vector.multi_reduction <maximumf>, %0, %cst_2 [1] : vector<1x4x256xf32> to vector<1x256xf32>
    %3 = tpu.concatenate %1, %2 in 0 : vector<1x256xf32>, vector<1x256xf32> -> vector<2x256xf32>
    %cst_3 = arith.constant 0.000000e+00 : f32
    %4 = vector.broadcast %cst_3 : f32 to vector<2x256xf32>
    %cst_4 = arith.constant 0.000000e+00 : f32
    %5 = vector.broadcast %cst_4 : f32 to vector<2x256xf32>
    %c51_i32 = arith.constant 51 : i32
    %6 = tpu.dynamic_rotate %3 by %c51_i32 dim 1 : vector<2x256xf32>, i32 -> vector<2x256xf32>
    %c0_5 = arith.constant 0 : index
    %c0_6 = arith.constant 0 : index
    %c0_7 = arith.constant 0 : index
    %7 = vector.load %arg1[%c0_5, %c0_6, %c0_7] : memref<49x2x256xf32, #tpu.memory_space<vmem>>, vector<1x2x256xf32>
    %8 = vector.shape_cast %7 : vector<1x2x256xf32> to vector<2x256xf32>
    %9 = arith.mulf %6, %8 : vector<2x256xf32>
    %10 = arith.addf %4, %9 : vector<2x256xf32>
    %c50_i32 = arith.constant 50 : i32
    %11 = tpu.dynamic_rotate %3 by %c50_i32 dim 1 : vector<2x256xf32>, i32 -> vector<2x256xf32>
    %c1 = arith.constant 1 : index
    %c0_8 = arith.constant 0 : index
    %c0_9 = arith.constant 0 : index
    %12 = vector.load %arg1[%c1, %c0_8, %c0_9] : memref<49x2x256xf32, #tpu.memory_space<vmem>>, vector<1x2x256xf32>
    %13 = vector.shape_cast %12 : vector<1x2x256xf32> to vector<2x256xf32>
    %14 = arith.mulf %11, %13 : vector<2x256xf32>
    %15 = arith.addf %5, %14 : vector<2x256xf32>
    %c49_i32 = arith.constant 49 : i32
    %16 = tpu.dynamic_rotate %3 by %c49_i32 dim 1 : vector<2x256xf32>, i32 -> vector<2x256xf32>
    %c2 = arith.constant 2 : index
    %c0_10 = arith.constant 0 : index
    %c0_11 = arith.constant 0 : index
    %17 = vector.load %arg1[%c2, %c0_10, %c0_11] : memref<49x2x256xf32, #tpu.memory_space<vmem>>, vector<1x2x256xf32>
    %18 = vector.shape_cast %17 : vector<1x2x256xf32> to vector<2x256xf32>
    %19 = arith.mulf %16, %18 : vector<2x256xf32>
    %20 = arith.addf %10, %19 : vector<2x256xf32>
    %c48_i32 = arith.constant 48 : i32
    %21 = tpu.dynamic_rotate %3 by %c48_i32 dim 1 : vector<2x256xf32>, i32 -> vector<2x256xf32>
    %c3 = arith.constant 3 : index
    %c0_12 = arith.constant 0 : index
    %c0_13 = arith.constant 0 : index
    %22 = vector.load %arg1[%c3, %c0_12, %c0_13] : memref<49x2x256xf32, #tpu.memory_space<vmem>>, vector<1x2x256xf32>
    %23 = vector.shape_cast %22 : vector<1x2x256xf32> to vector<2x256xf32>
    %24 = arith.mulf %21, %23 : vector<2x256xf32>
    %25 = arith.addf %15, %24 : vector<2x256xf32>
    %c47_i32 = arith.constant 47 : i32
    %26 = tpu.dynamic_rotate %3 by %c47_i32 dim 1 : vector<2x256xf32>, i32 -> vector<2x256xf32>
    %c4 = arith.constant 4 : index
    %c0_14 = arith.constant 0 : index
    %c0_15 = arith.constant 0 : index
    %27 = vector.load %arg1[%c4, %c0_14, %c0_15] : memref<49x2x256xf32, #tpu.memory_space<vmem>>, vector<1x2x256xf32>
    %28 = vector.shape_cast %27 : vector<1x2x256xf32> to vector<2x256xf32>
    %29 = arith.mulf %26, %28 : vector<2x256xf32>
    %30 = arith.addf %20, %29 : vector<2x256xf32>
    %c46_i32 = arith.constant 46 : i32
    %31 = tpu.dynamic_rotate %3 by %c46_i32 dim 1 : vector<2x256xf32>, i32 -> vector<2x256xf32>
    %c5 = arith.constant 5 : index
    %c0_16 = arith.constant 0 : index
    %c0_17 = arith.constant 0 : index
    %32 = vector.load %arg1[%c5, %c0_16, %c0_17] : memref<49x2x256xf32, #tpu.memory_space<vmem>>, vector<1x2x256xf32>
    %33 = vector.shape_cast %32 : vector<1x2x256xf32> to vector<2x256xf32>
    %34 = arith.mulf %31, %33 : vector<2x256xf32>
    %35 = arith.addf %25, %34 : vector<2x256xf32>
    %c45_i32 = arith.constant 45 : i32
    %36 = tpu.dynamic_rotate %3 by %c45_i32 dim 1 : vector<2x256xf32>, i32 -> vector<2x256xf32>
    %c6 = arith.constant 6 : index
    %c0_18 = arith.constant 0 : index
    %c0_19 = arith.constant 0 : index
    %37 = vector.load %arg1[%c6, %c0_18, %c0_19] : memref<49x2x256xf32, #tpu.memory_space<vmem>>, vector<1x2x256xf32>
    %38 = vector.shape_cast %37 : vector<1x2x256xf32> to vector<2x256xf32>
    %39 = arith.mulf %36, %38 : vector<2x256xf32>
    %40 = arith.addf %30, %39 : vector<2x256xf32>
    %c35_i32 = arith.constant 35 : i32
    %41 = tpu.dynamic_rotate %3 by %c35_i32 dim 1 : vector<2x256xf32>, i32 -> vector<2x256xf32>
    %c7 = arith.constant 7 : index
    %c0_20 = arith.constant 0 : index
    %c0_21 = arith.constant 0 : index
    %42 = vector.load %arg1[%c7, %c0_20, %c0_21] : memref<49x2x256xf32, #tpu.memory_space<vmem>>, vector<1x2x256xf32>
    %43 = vector.shape_cast %42 : vector<1x2x256xf32> to vector<2x256xf32>
    %44 = arith.mulf %41, %43 : vector<2x256xf32>
    %45 = arith.addf %35, %44 : vector<2x256xf32>
    %c34_i32 = arith.constant 34 : i32
    %46 = tpu.dynamic_rotate %3 by %c34_i32 dim 1 : vector<2x256xf32>, i32 -> vector<2x256xf32>
    %c8 = arith.constant 8 : index
    %c0_22 = arith.constant 0 : index
    %c0_23 = arith.constant 0 : index
    %47 = vector.load %arg1[%c8, %c0_22, %c0_23] : memref<49x2x256xf32, #tpu.memory_space<vmem>>, vector<1x2x256xf32>
    %48 = vector.shape_cast %47 : vector<1x2x256xf32> to vector<2x256xf32>
    %49 = arith.mulf %46, %48 : vector<2x256xf32>
    %50 = arith.addf %40, %49 : vector<2x256xf32>
    %c33_i32 = arith.constant 33 : i32
    %51 = tpu.dynamic_rotate %3 by %c33_i32 dim 1 : vector<2x256xf32>, i32 -> vector<2x256xf32>
    %c9 = arith.constant 9 : index
    %c0_24 = arith.constant 0 : index
    %c0_25 = arith.constant 0 : index
    %52 = vector.load %arg1[%c9, %c0_24, %c0_25] : memref<49x2x256xf32, #tpu.memory_space<vmem>>, vector<1x2x256xf32>
    %53 = vector.shape_cast %52 : vector<1x2x256xf32> to vector<2x256xf32>
    %54 = arith.mulf %51, %53 : vector<2x256xf32>
    %55 = arith.addf %45, %54 : vector<2x256xf32>
    %c32_i32 = arith.constant 32 : i32
    %56 = tpu.dynamic_rotate %3 by %c32_i32 dim 1 : vector<2x256xf32>, i32 -> vector<2x256xf32>
    %c10 = arith.constant 10 : index
    %c0_26 = arith.constant 0 : index
    %c0_27 = arith.constant 0 : index
    %57 = vector.load %arg1[%c10, %c0_26, %c0_27] : memref<49x2x256xf32, #tpu.memory_space<vmem>>, vector<1x2x256xf32>
    %58 = vector.shape_cast %57 : vector<1x2x256xf32> to vector<2x256xf32>
    %59 = arith.mulf %56, %58 : vector<2x256xf32>
    %60 = arith.addf %50, %59 : vector<2x256xf32>
    %c31_i32 = arith.constant 31 : i32
    %61 = tpu.dynamic_rotate %3 by %c31_i32 dim 1 : vector<2x256xf32>, i32 -> vector<2x256xf32>
    %c11 = arith.constant 11 : index
    %c0_28 = arith.constant 0 : index
    %c0_29 = arith.constant 0 : index
    %62 = vector.load %arg1[%c11, %c0_28, %c0_29] : memref<49x2x256xf32, #tpu.memory_space<vmem>>, vector<1x2x256xf32>
    %63 = vector.shape_cast %62 : vector<1x2x256xf32> to vector<2x256xf32>
    %64 = arith.mulf %61, %63 : vector<2x256xf32>
    %65 = arith.addf %55, %64 : vector<2x256xf32>
    %c30_i32 = arith.constant 30 : i32
    %66 = tpu.dynamic_rotate %3 by %c30_i32 dim 1 : vector<2x256xf32>, i32 -> vector<2x256xf32>
    %c12 = arith.constant 12 : index
    %c0_30 = arith.constant 0 : index
    %c0_31 = arith.constant 0 : index
    %67 = vector.load %arg1[%c12, %c0_30, %c0_31] : memref<49x2x256xf32, #tpu.memory_space<vmem>>, vector<1x2x256xf32>
    %68 = vector.shape_cast %67 : vector<1x2x256xf32> to vector<2x256xf32>
    %69 = arith.mulf %66, %68 : vector<2x256xf32>
    %70 = arith.addf %60, %69 : vector<2x256xf32>
    %c29_i32 = arith.constant 29 : i32
    %71 = tpu.dynamic_rotate %3 by %c29_i32 dim 1 : vector<2x256xf32>, i32 -> vector<2x256xf32>
    %c13 = arith.constant 13 : index
    %c0_32 = arith.constant 0 : index
    %c0_33 = arith.constant 0 : index
    %72 = vector.load %arg1[%c13, %c0_32, %c0_33] : memref<49x2x256xf32, #tpu.memory_space<vmem>>, vector<1x2x256xf32>
    %73 = vector.shape_cast %72 : vector<1x2x256xf32> to vector<2x256xf32>
    %74 = arith.mulf %71, %73 : vector<2x256xf32>
    %75 = arith.addf %65, %74 : vector<2x256xf32>
    %c19_i32 = arith.constant 19 : i32
    %76 = tpu.dynamic_rotate %3 by %c19_i32 dim 1 : vector<2x256xf32>, i32 -> vector<2x256xf32>
    %c14 = arith.constant 14 : index
    %c0_34 = arith.constant 0 : index
    %c0_35 = arith.constant 0 : index
    %77 = vector.load %arg1[%c14, %c0_34, %c0_35] : memref<49x2x256xf32, #tpu.memory_space<vmem>>, vector<1x2x256xf32>
    %78 = vector.shape_cast %77 : vector<1x2x256xf32> to vector<2x256xf32>
    %79 = arith.mulf %76, %78 : vector<2x256xf32>
    %80 = arith.addf %70, %79 : vector<2x256xf32>
    %c18_i32 = arith.constant 18 : i32
    %81 = tpu.dynamic_rotate %3 by %c18_i32 dim 1 : vector<2x256xf32>, i32 -> vector<2x256xf32>
    %c15 = arith.constant 15 : index
    %c0_36 = arith.constant 0 : index
    %c0_37 = arith.constant 0 : index
    %82 = vector.load %arg1[%c15, %c0_36, %c0_37] : memref<49x2x256xf32, #tpu.memory_space<vmem>>, vector<1x2x256xf32>
    %83 = vector.shape_cast %82 : vector<1x2x256xf32> to vector<2x256xf32>
    %84 = arith.mulf %81, %83 : vector<2x256xf32>
    %85 = arith.addf %75, %84 : vector<2x256xf32>
    %c17_i32 = arith.constant 17 : i32
    %86 = tpu.dynamic_rotate %3 by %c17_i32 dim 1 : vector<2x256xf32>, i32 -> vector<2x256xf32>
    %c16 = arith.constant 16 : index
    %c0_38 = arith.constant 0 : index
    %c0_39 = arith.constant 0 : index
    %87 = vector.load %arg1[%c16, %c0_38, %c0_39] : memref<49x2x256xf32, #tpu.memory_space<vmem>>, vector<1x2x256xf32>
    %88 = vector.shape_cast %87 : vector<1x2x256xf32> to vector<2x256xf32>
    %89 = arith.mulf %86, %88 : vector<2x256xf32>
    %90 = arith.addf %80, %89 : vector<2x256xf32>
    %c16_i32 = arith.constant 16 : i32
    %91 = tpu.dynamic_rotate %3 by %c16_i32 dim 1 : vector<2x256xf32>, i32 -> vector<2x256xf32>
    %c17 = arith.constant 17 : index
    %c0_40 = arith.constant 0 : index
    %c0_41 = arith.constant 0 : index
    %92 = vector.load %arg1[%c17, %c0_40, %c0_41] : memref<49x2x256xf32, #tpu.memory_space<vmem>>, vector<1x2x256xf32>
    %93 = vector.shape_cast %92 : vector<1x2x256xf32> to vector<2x256xf32>
    %94 = arith.mulf %91, %93 : vector<2x256xf32>
    %95 = arith.addf %85, %94 : vector<2x256xf32>
    %c15_i32 = arith.constant 15 : i32
    %96 = tpu.dynamic_rotate %3 by %c15_i32 dim 1 : vector<2x256xf32>, i32 -> vector<2x256xf32>
    %c18 = arith.constant 18 : index
    %c0_42 = arith.constant 0 : index
    %c0_43 = arith.constant 0 : index
    %97 = vector.load %arg1[%c18, %c0_42, %c0_43] : memref<49x2x256xf32, #tpu.memory_space<vmem>>, vector<1x2x256xf32>
    %98 = vector.shape_cast %97 : vector<1x2x256xf32> to vector<2x256xf32>
    %99 = arith.mulf %96, %98 : vector<2x256xf32>
    %100 = arith.addf %90, %99 : vector<2x256xf32>
    %c14_i32 = arith.constant 14 : i32
    %101 = tpu.dynamic_rotate %3 by %c14_i32 dim 1 : vector<2x256xf32>, i32 -> vector<2x256xf32>
    %c19 = arith.constant 19 : index
    %c0_44 = arith.constant 0 : index
    %c0_45 = arith.constant 0 : index
    %102 = vector.load %arg1[%c19, %c0_44, %c0_45] : memref<49x2x256xf32, #tpu.memory_space<vmem>>, vector<1x2x256xf32>
    %103 = vector.shape_cast %102 : vector<1x2x256xf32> to vector<2x256xf32>
    %104 = arith.mulf %101, %103 : vector<2x256xf32>
    %105 = arith.addf %95, %104 : vector<2x256xf32>
    %c13_i32 = arith.constant 13 : i32
    %106 = tpu.dynamic_rotate %3 by %c13_i32 dim 1 : vector<2x256xf32>, i32 -> vector<2x256xf32>
    %c20 = arith.constant 20 : index
    %c0_46 = arith.constant 0 : index
    %c0_47 = arith.constant 0 : index
    %107 = vector.load %arg1[%c20, %c0_46, %c0_47] : memref<49x2x256xf32, #tpu.memory_space<vmem>>, vector<1x2x256xf32>
    %108 = vector.shape_cast %107 : vector<1x2x256xf32> to vector<2x256xf32>
    %109 = arith.mulf %106, %108 : vector<2x256xf32>
    %110 = arith.addf %100, %109 : vector<2x256xf32>
    %c3_i32 = arith.constant 3 : i32
    %111 = tpu.dynamic_rotate %3 by %c3_i32 dim 1 : vector<2x256xf32>, i32 -> vector<2x256xf32>
    %c21 = arith.constant 21 : index
    %c0_48 = arith.constant 0 : index
    %c0_49 = arith.constant 0 : index
    %112 = vector.load %arg1[%c21, %c0_48, %c0_49] : memref<49x2x256xf32, #tpu.memory_space<vmem>>, vector<1x2x256xf32>
    %113 = vector.shape_cast %112 : vector<1x2x256xf32> to vector<2x256xf32>
    %114 = arith.mulf %111, %113 : vector<2x256xf32>
    %115 = arith.addf %105, %114 : vector<2x256xf32>
    %c2_i32 = arith.constant 2 : i32
    %116 = tpu.dynamic_rotate %3 by %c2_i32 dim 1 : vector<2x256xf32>, i32 -> vector<2x256xf32>
    %c22 = arith.constant 22 : index
    %c0_50 = arith.constant 0 : index
    %c0_51 = arith.constant 0 : index
    %117 = vector.load %arg1[%c22, %c0_50, %c0_51] : memref<49x2x256xf32, #tpu.memory_space<vmem>>, vector<1x2x256xf32>
    %118 = vector.shape_cast %117 : vector<1x2x256xf32> to vector<2x256xf32>
    %119 = arith.mulf %116, %118 : vector<2x256xf32>
    %120 = arith.addf %110, %119 : vector<2x256xf32>
    %c1_i32 = arith.constant 1 : i32
    %121 = tpu.dynamic_rotate %3 by %c1_i32 dim 1 : vector<2x256xf32>, i32 -> vector<2x256xf32>
    %c23 = arith.constant 23 : index
    %c0_52 = arith.constant 0 : index
    %c0_53 = arith.constant 0 : index
    %122 = vector.load %arg1[%c23, %c0_52, %c0_53] : memref<49x2x256xf32, #tpu.memory_space<vmem>>, vector<1x2x256xf32>
    %123 = vector.shape_cast %122 : vector<1x2x256xf32> to vector<2x256xf32>
    %124 = arith.mulf %121, %123 : vector<2x256xf32>
    %125 = arith.addf %115, %124 : vector<2x256xf32>
    %c24 = arith.constant 24 : index
    %c0_54 = arith.constant 0 : index
    %c0_55 = arith.constant 0 : index
    %126 = vector.load %arg1[%c24, %c0_54, %c0_55] : memref<49x2x256xf32, #tpu.memory_space<vmem>>, vector<1x2x256xf32>
    %127 = vector.shape_cast %126 : vector<1x2x256xf32> to vector<2x256xf32>
    %128 = arith.mulf %3, %127 : vector<2x256xf32>
    %129 = arith.addf %120, %128 : vector<2x256xf32>
    %c255_i32 = arith.constant 255 : i32
    %130 = tpu.dynamic_rotate %3 by %c255_i32 dim 1 : vector<2x256xf32>, i32 -> vector<2x256xf32>
    %c25 = arith.constant 25 : index
    %c0_56 = arith.constant 0 : index
    %c0_57 = arith.constant 0 : index
    %131 = vector.load %arg1[%c25, %c0_56, %c0_57] : memref<49x2x256xf32, #tpu.memory_space<vmem>>, vector<1x2x256xf32>
    %132 = vector.shape_cast %131 : vector<1x2x256xf32> to vector<2x256xf32>
    %133 = arith.mulf %130, %132 : vector<2x256xf32>
    %134 = arith.addf %125, %133 : vector<2x256xf32>
    %c254_i32 = arith.constant 254 : i32
    %135 = tpu.dynamic_rotate %3 by %c254_i32 dim 1 : vector<2x256xf32>, i32 -> vector<2x256xf32>
    %c26 = arith.constant 26 : index
    %c0_58 = arith.constant 0 : index
    %c0_59 = arith.constant 0 : index
    %136 = vector.load %arg1[%c26, %c0_58, %c0_59] : memref<49x2x256xf32, #tpu.memory_space<vmem>>, vector<1x2x256xf32>
    %137 = vector.shape_cast %136 : vector<1x2x256xf32> to vector<2x256xf32>
    %138 = arith.mulf %135, %137 : vector<2x256xf32>
    %139 = arith.addf %129, %138 : vector<2x256xf32>
    %c253_i32 = arith.constant 253 : i32
    %140 = tpu.dynamic_rotate %3 by %c253_i32 dim 1 : vector<2x256xf32>, i32 -> vector<2x256xf32>
    %c27 = arith.constant 27 : index
    %c0_60 = arith.constant 0 : index
    %c0_61 = arith.constant 0 : index
    %141 = vector.load %arg1[%c27, %c0_60, %c0_61] : memref<49x2x256xf32, #tpu.memory_space<vmem>>, vector<1x2x256xf32>
    %142 = vector.shape_cast %141 : vector<1x2x256xf32> to vector<2x256xf32>
    %143 = arith.mulf %140, %142 : vector<2x256xf32>
    %144 = arith.addf %134, %143 : vector<2x256xf32>
    %c243_i32 = arith.constant 243 : i32
    %145 = tpu.dynamic_rotate %3 by %c243_i32 dim 1 : vector<2x256xf32>, i32 -> vector<2x256xf32>
    %c28 = arith.constant 28 : index
    %c0_62 = arith.constant 0 : index
    %c0_63 = arith.constant 0 : index
    %146 = vector.load %arg1[%c28, %c0_62, %c0_63] : memref<49x2x256xf32, #tpu.memory_space<vmem>>, vector<1x2x256xf32>
    %147 = vector.shape_cast %146 : vector<1x2x256xf32> to vector<2x256xf32>
    %148 = arith.mulf %145, %147 : vector<2x256xf32>
    %149 = arith.addf %139, %148 : vector<2x256xf32>
    %c242_i32 = arith.constant 242 : i32
    %150 = tpu.dynamic_rotate %3 by %c242_i32 dim 1 : vector<2x256xf32>, i32 -> vector<2x256xf32>
    %c29 = arith.constant 29 : index
    %c0_64 = arith.constant 0 : index
    %c0_65 = arith.constant 0 : index
    %151 = vector.load %arg1[%c29, %c0_64, %c0_65] : memref<49x2x256xf32, #tpu.memory_space<vmem>>, vector<1x2x256xf32>
    %152 = vector.shape_cast %151 : vector<1x2x256xf32> to vector<2x256xf32>
    %153 = arith.mulf %150, %152 : vector<2x256xf32>
    %154 = arith.addf %144, %153 : vector<2x256xf32>
    %c241_i32 = arith.constant 241 : i32
    %155 = tpu.dynamic_rotate %3 by %c241_i32 dim 1 : vector<2x256xf32>, i32 -> vector<2x256xf32>
    %c30 = arith.constant 30 : index
    %c0_66 = arith.constant 0 : index
    %c0_67 = arith.constant 0 : index
    %156 = vector.load %arg1[%c30, %c0_66, %c0_67] : memref<49x2x256xf32, #tpu.memory_space<vmem>>, vector<1x2x256xf32>
    %157 = vector.shape_cast %156 : vector<1x2x256xf32> to vector<2x256xf32>
    %158 = arith.mulf %155, %157 : vector<2x256xf32>
    %159 = arith.addf %149, %158 : vector<2x256xf32>
    %c240_i32 = arith.constant 240 : i32
    %160 = tpu.dynamic_rotate %3 by %c240_i32 dim 1 : vector<2x256xf32>, i32 -> vector<2x256xf32>
    %c31 = arith.constant 31 : index
    %c0_68 = arith.constant 0 : index
    %c0_69 = arith.constant 0 : index
    %161 = vector.load %arg1[%c31, %c0_68, %c0_69] : memref<49x2x256xf32, #tpu.memory_space<vmem>>, vector<1x2x256xf32>
    %162 = vector.shape_cast %161 : vector<1x2x256xf32> to vector<2x256xf32>
    %163 = arith.mulf %160, %162 : vector<2x256xf32>
    %164 = arith.addf %154, %163 : vector<2x256xf32>
    %c239_i32 = arith.constant 239 : i32
    %165 = tpu.dynamic_rotate %3 by %c239_i32 dim 1 : vector<2x256xf32>, i32 -> vector<2x256xf32>
    %c32 = arith.constant 32 : index
    %c0_70 = arith.constant 0 : index
    %c0_71 = arith.constant 0 : index
    %166 = vector.load %arg1[%c32, %c0_70, %c0_71] : memref<49x2x256xf32, #tpu.memory_space<vmem>>, vector<1x2x256xf32>
    %167 = vector.shape_cast %166 : vector<1x2x256xf32> to vector<2x256xf32>
    %168 = arith.mulf %165, %167 : vector<2x256xf32>
    %169 = arith.addf %159, %168 : vector<2x256xf32>
    %c238_i32 = arith.constant 238 : i32
    %170 = tpu.dynamic_rotate %3 by %c238_i32 dim 1 : vector<2x256xf32>, i32 -> vector<2x256xf32>
    %c33 = arith.constant 33 : index
    %c0_72 = arith.constant 0 : index
    %c0_73 = arith.constant 0 : index
    %171 = vector.load %arg1[%c33, %c0_72, %c0_73] : memref<49x2x256xf32, #tpu.memory_space<vmem>>, vector<1x2x256xf32>
    %172 = vector.shape_cast %171 : vector<1x2x256xf32> to vector<2x256xf32>
    %173 = arith.mulf %170, %172 : vector<2x256xf32>
    %174 = arith.addf %164, %173 : vector<2x256xf32>
    %c237_i32 = arith.constant 237 : i32
    %175 = tpu.dynamic_rotate %3 by %c237_i32 dim 1 : vector<2x256xf32>, i32 -> vector<2x256xf32>
    %c34 = arith.constant 34 : index
    %c0_74 = arith.constant 0 : index
    %c0_75 = arith.constant 0 : index
    %176 = vector.load %arg1[%c34, %c0_74, %c0_75] : memref<49x2x256xf32, #tpu.memory_space<vmem>>, vector<1x2x256xf32>
    %177 = vector.shape_cast %176 : vector<1x2x256xf32> to vector<2x256xf32>
    %178 = arith.mulf %175, %177 : vector<2x256xf32>
    %179 = arith.addf %169, %178 : vector<2x256xf32>
    %c227_i32 = arith.constant 227 : i32
    %180 = tpu.dynamic_rotate %3 by %c227_i32 dim 1 : vector<2x256xf32>, i32 -> vector<2x256xf32>
    %c35 = arith.constant 35 : index
    %c0_76 = arith.constant 0 : index
    %c0_77 = arith.constant 0 : index
    %181 = vector.load %arg1[%c35, %c0_76, %c0_77] : memref<49x2x256xf32, #tpu.memory_space<vmem>>, vector<1x2x256xf32>
    %182 = vector.shape_cast %181 : vector<1x2x256xf32> to vector<2x256xf32>
    %183 = arith.mulf %180, %182 : vector<2x256xf32>
    %184 = arith.addf %174, %183 : vector<2x256xf32>
    %c226_i32 = arith.constant 226 : i32
    %185 = tpu.dynamic_rotate %3 by %c226_i32 dim 1 : vector<2x256xf32>, i32 -> vector<2x256xf32>
    %c36 = arith.constant 36 : index
    %c0_78 = arith.constant 0 : index
    %c0_79 = arith.constant 0 : index
    %186 = vector.load %arg1[%c36, %c0_78, %c0_79] : memref<49x2x256xf32, #tpu.memory_space<vmem>>, vector<1x2x256xf32>
    %187 = vector.shape_cast %186 : vector<1x2x256xf32> to vector<2x256xf32>
    %188 = arith.mulf %185, %187 : vector<2x256xf32>
    %189 = arith.addf %179, %188 : vector<2x256xf32>
    %c225_i32 = arith.constant 225 : i32
    %190 = tpu.dynamic_rotate %3 by %c225_i32 dim 1 : vector<2x256xf32>, i32 -> vector<2x256xf32>
    %c37 = arith.constant 37 : index
    %c0_80 = arith.constant 0 : index
    %c0_81 = arith.constant 0 : index
    %191 = vector.load %arg1[%c37, %c0_80, %c0_81] : memref<49x2x256xf32, #tpu.memory_space<vmem>>, vector<1x2x256xf32>
    %192 = vector.shape_cast %191 : vector<1x2x256xf32> to vector<2x256xf32>
    %193 = arith.mulf %190, %192 : vector<2x256xf32>
    %194 = arith.addf %184, %193 : vector<2x256xf32>
    %c224_i32 = arith.constant 224 : i32
    %195 = tpu.dynamic_rotate %3 by %c224_i32 dim 1 : vector<2x256xf32>, i32 -> vector<2x256xf32>
    %c38 = arith.constant 38 : index
    %c0_82 = arith.constant 0 : index
    %c0_83 = arith.constant 0 : index
    %196 = vector.load %arg1[%c38, %c0_82, %c0_83] : memref<49x2x256xf32, #tpu.memory_space<vmem>>, vector<1x2x256xf32>
    %197 = vector.shape_cast %196 : vector<1x2x256xf32> to vector<2x256xf32>
    %198 = arith.mulf %195, %197 : vector<2x256xf32>
    %199 = arith.addf %189, %198 : vector<2x256xf32>
    %c223_i32 = arith.constant 223 : i32
    %200 = tpu.dynamic_rotate %3 by %c223_i32 dim 1 : vector<2x256xf32>, i32 -> vector<2x256xf32>
    %c39 = arith.constant 39 : index
    %c0_84 = arith.constant 0 : index
    %c0_85 = arith.constant 0 : index
    %201 = vector.load %arg1[%c39, %c0_84, %c0_85] : memref<49x2x256xf32, #tpu.memory_space<vmem>>, vector<1x2x256xf32>
    %202 = vector.shape_cast %201 : vector<1x2x256xf32> to vector<2x256xf32>
    %203 = arith.mulf %200, %202 : vector<2x256xf32>
    %204 = arith.addf %194, %203 : vector<2x256xf32>
    %c222_i32 = arith.constant 222 : i32
    %205 = tpu.dynamic_rotate %3 by %c222_i32 dim 1 : vector<2x256xf32>, i32 -> vector<2x256xf32>
    %c40 = arith.constant 40 : index
    %c0_86 = arith.constant 0 : index
    %c0_87 = arith.constant 0 : index
    %206 = vector.load %arg1[%c40, %c0_86, %c0_87] : memref<49x2x256xf32, #tpu.memory_space<vmem>>, vector<1x2x256xf32>
    %207 = vector.shape_cast %206 : vector<1x2x256xf32> to vector<2x256xf32>
    %208 = arith.mulf %205, %207 : vector<2x256xf32>
    %209 = arith.addf %199, %208 : vector<2x256xf32>
    %c221_i32 = arith.constant 221 : i32
    %210 = tpu.dynamic_rotate %3 by %c221_i32 dim 1 : vector<2x256xf32>, i32 -> vector<2x256xf32>
    %c41 = arith.constant 41 : index
    %c0_88 = arith.constant 0 : index
    %c0_89 = arith.constant 0 : index
    %211 = vector.load %arg1[%c41, %c0_88, %c0_89] : memref<49x2x256xf32, #tpu.memory_space<vmem>>, vector<1x2x256xf32>
    %212 = vector.shape_cast %211 : vector<1x2x256xf32> to vector<2x256xf32>
    %213 = arith.mulf %210, %212 : vector<2x256xf32>
    %214 = arith.addf %204, %213 : vector<2x256xf32>
    %c211_i32 = arith.constant 211 : i32
    %215 = tpu.dynamic_rotate %3 by %c211_i32 dim 1 : vector<2x256xf32>, i32 -> vector<2x256xf32>
    %c42 = arith.constant 42 : index
    %c0_90 = arith.constant 0 : index
    %c0_91 = arith.constant 0 : index
    %216 = vector.load %arg1[%c42, %c0_90, %c0_91] : memref<49x2x256xf32, #tpu.memory_space<vmem>>, vector<1x2x256xf32>
    %217 = vector.shape_cast %216 : vector<1x2x256xf32> to vector<2x256xf32>
    %218 = arith.mulf %215, %217 : vector<2x256xf32>
    %219 = arith.addf %209, %218 : vector<2x256xf32>
    %c210_i32 = arith.constant 210 : i32
    %220 = tpu.dynamic_rotate %3 by %c210_i32 dim 1 : vector<2x256xf32>, i32 -> vector<2x256xf32>
    %c43 = arith.constant 43 : index
    %c0_92 = arith.constant 0 : index
    %c0_93 = arith.constant 0 : index
    %221 = vector.load %arg1[%c43, %c0_92, %c0_93] : memref<49x2x256xf32, #tpu.memory_space<vmem>>, vector<1x2x256xf32>
    %222 = vector.shape_cast %221 : vector<1x2x256xf32> to vector<2x256xf32>
    %223 = arith.mulf %220, %222 : vector<2x256xf32>
    %224 = arith.addf %214, %223 : vector<2x256xf32>
    %c209_i32 = arith.constant 209 : i32
    %225 = tpu.dynamic_rotate %3 by %c209_i32 dim 1 : vector<2x256xf32>, i32 -> vector<2x256xf32>
    %c44 = arith.constant 44 : index
    %c0_94 = arith.constant 0 : index
    %c0_95 = arith.constant 0 : index
    %226 = vector.load %arg1[%c44, %c0_94, %c0_95] : memref<49x2x256xf32, #tpu.memory_space<vmem>>, vector<1x2x256xf32>
    %227 = vector.shape_cast %226 : vector<1x2x256xf32> to vector<2x256xf32>
    %228 = arith.mulf %225, %227 : vector<2x256xf32>
    %229 = arith.addf %219, %228 : vector<2x256xf32>
    %c208_i32 = arith.constant 208 : i32
    %230 = tpu.dynamic_rotate %3 by %c208_i32 dim 1 : vector<2x256xf32>, i32 -> vector<2x256xf32>
    %c45 = arith.constant 45 : index
    %c0_96 = arith.constant 0 : index
    %c0_97 = arith.constant 0 : index
    %231 = vector.load %arg1[%c45, %c0_96, %c0_97] : memref<49x2x256xf32, #tpu.memory_space<vmem>>, vector<1x2x256xf32>
    %232 = vector.shape_cast %231 : vector<1x2x256xf32> to vector<2x256xf32>
    %233 = arith.mulf %230, %232 : vector<2x256xf32>
    %234 = arith.addf %224, %233 : vector<2x256xf32>
    %c207_i32 = arith.constant 207 : i32
    %235 = tpu.dynamic_rotate %3 by %c207_i32 dim 1 : vector<2x256xf32>, i32 -> vector<2x256xf32>
    %c46 = arith.constant 46 : index
    %c0_98 = arith.constant 0 : index
    %c0_99 = arith.constant 0 : index
    %236 = vector.load %arg1[%c46, %c0_98, %c0_99] : memref<49x2x256xf32, #tpu.memory_space<vmem>>, vector<1x2x256xf32>
    %237 = vector.shape_cast %236 : vector<1x2x256xf32> to vector<2x256xf32>
    %238 = arith.mulf %235, %237 : vector<2x256xf32>
    %239 = arith.addf %229, %238 : vector<2x256xf32>
    %c206_i32 = arith.constant 206 : i32
    %240 = tpu.dynamic_rotate %3 by %c206_i32 dim 1 : vector<2x256xf32>, i32 -> vector<2x256xf32>
    %c47 = arith.constant 47 : index
    %c0_100 = arith.constant 0 : index
    %c0_101 = arith.constant 0 : index
    %241 = vector.load %arg1[%c47, %c0_100, %c0_101] : memref<49x2x256xf32, #tpu.memory_space<vmem>>, vector<1x2x256xf32>
    %242 = vector.shape_cast %241 : vector<1x2x256xf32> to vector<2x256xf32>
    %243 = arith.mulf %240, %242 : vector<2x256xf32>
    %244 = arith.addf %234, %243 : vector<2x256xf32>
    %c205_i32 = arith.constant 205 : i32
    %245 = tpu.dynamic_rotate %3 by %c205_i32 dim 1 : vector<2x256xf32>, i32 -> vector<2x256xf32>
    %c48 = arith.constant 48 : index
    %c0_102 = arith.constant 0 : index
    %c0_103 = arith.constant 0 : index
    %246 = vector.load %arg1[%c48, %c0_102, %c0_103] : memref<49x2x256xf32, #tpu.memory_space<vmem>>, vector<1x2x256xf32>
    %247 = vector.shape_cast %246 : vector<1x2x256xf32> to vector<2x256xf32>
    %248 = arith.mulf %245, %247 : vector<2x256xf32>
    %249 = arith.addf %239, %248 : vector<2x256xf32>
    %250 = arith.addf %249, %244 : vector<2x256xf32>
    %251 = vector.extract_strided_slice %250 {offsets = [0, 0], sizes = [1, 256], strides = [1, 1]} : vector<2x256xf32> to vector<1x256xf32>
    %252 = vector.extract_strided_slice %250 {offsets = [1, 0], sizes = [1, 256], strides = [1, 1]} : vector<2x256xf32> to vector<1x256xf32>
    %253 = arith.addf %251, %252 : vector<1x256xf32>
    %254 = arith.negf %253 : vector<1x256xf32>
    %255 = math.exp %254 : vector<1x256xf32>
    %cst_104 = arith.constant 1.000000e+00 : f32
    %256 = vector.broadcast %cst_104 : f32 to vector<1x256xf32>
    %257 = arith.addf %256, %255 : vector<1x256xf32>
    %258 = arith.divf %256, %257 : vector<1x256xf32>
    %c0_105 = arith.constant 0 : index
    %c0_106 = arith.constant 0 : index
    %c0_107 = arith.constant 0 : index
    %259 = vector.load %arg2[%c0_105, %c0_106, %c0_107] : memref<1x4x256xf32, #tpu.memory_space<vmem>>, vector<1x4x256xf32>
    %260 = vector.shape_cast %258 : vector<1x256xf32> to vector<1x1x256xf32>
    %261 = vector.broadcast %260 : vector<1x1x256xf32> to vector<1x4x256xf32>
    %262 = arith.mulf %259, %261 : vector<1x4x256xf32>
    %c0_108 = arith.constant 0 : index
    %c0_109 = arith.constant 0 : index
    %c0_110 = arith.constant 0 : index
    %263 = vector.load %arg3[%c0_108, %c0_109, %c0_110] : memref<1x4x256xf32, #tpu.memory_space<vmem>>, vector<1x4x256xf32>
    tpu.vector_store %arg3[%c0_108, %c0_109, %c0_110], %262 {strides = array<i32>} : memref<1x4x256xf32, #tpu.memory_space<vmem>>, vector<1x4x256xf32>,
    return
  }
  func.func @transform_0(%arg0: i32) -> (i32, i32, i32) {
    %c0_i32 = arith.constant 0 : i32
    %c0_i32_0 = arith.constant 0 : i32
    %c0_i32_1 = arith.constant 0 : i32
    %c0_i32_2 = arith.constant 0 : i32
    return %c0_i32, %c0_i32_0, %c0_i32_1 : i32, i32, i32
  }
  func.func @transform_1(%arg0: i32) -> (i32, i32, i32) {
    %c0_i32 = arith.constant 0 : i32
    %c0_i32_0 = arith.constant 0 : i32
    %c0_i32_1 = arith.constant 0 : i32
    return %arg0, %c0_i32, %c0_i32_0 : i32, i32, i32
  }
  func.func @transform_2(%arg0: i32) -> (i32, i32, i32) {
    %c0_i32 = arith.constant 0 : i32
    %c0_i32_0 = arith.constant 0 : i32
    %c0_i32_1 = arith.constant 0 : i32
    return %arg0, %c0_i32, %c0_i32_0 : i32, i32, i32
  }
}

</mosaic_0001>

<llo_original>
// kernel: tpu_custom_call.1
$region0: #{tpu_custom_call.1}
  #allocation0 [shape = 'u32[]', space=smem, size = 0x4, offset = 0x4, fixed_abs, tag = 'smem constant byte address 0x4 - core index']
  #allocation1 [shape = 'u32[72,128]{1,0:T(1,128)}', space=vmem, size = 0x9000, scoped, tag = 'internal scratch']
  %s0 = inlined_call_operand.hbm [shape: f32[49,2,256], index: 0, kind: input, shape index: {}]
  %s1 = inlined_call_operand.hbm [shape: f32[2,4,256], index: 1, kind: input, shape index: {}]
  %s2 = inlined_call_operand.hbm [shape: f32[2,4,256], index: 2, kind: output, shape index: {}]
  %s3 = sld [smem:[#allocation0]]
  $region49: #{tpu_custom_call.1} parent=0
    _
  %s5 = ssub.s32 1, %s3
  %s6 = scalar_select 0, %s5, %s3
  $region1: #{tpu_custom_call.1} parent=0
    #allocation2 [shape = 'u8[100352]{0}', space=vmem, size = 0x18800, scoped, tag = 'input window, operand 0, single buffered']
    #allocation3 [shape = 's32[2]{0}', space=sflag, size = 0x8, scoped, tag = 'scoped memory for tpu_custom_call.1']
    #allocation4 [shape = 's32[2]{0}', space=sflag, size = 0x8, scoped, tag = 'scoped memory for tpu_custom_call.1']
    #allocation5 [shape = 'u8[8192]{0}', space=vmem, size = 0x2000, scoped, tag = 'input window, operand 1']
    #allocation6 [shape = 's32[2]{0}', space=sflag, size = 0x8, scoped, tag = 'scoped memory for tpu_custom_call.1']
    #allocation7 [shape = 'u8[8192]{0}', space=vmem, size = 0x2000, scoped, tag = 'output window, operand 0']
    %7 = vsyncpa [#allocation3], 0
    %8 = vsyncpa [#allocation6], 0
    %s9 = scalar_lea.sflag [#allocation6], 1
    %10 = vsyncpa %s9, 0
    %11 = vsyncpa [#allocation4], 0
    %s12 = scalar_lea.sflag [#allocation4], 1
    %13 = vsyncpa %s12, 0
    loop: start=0, step=1, limit=4
    $region2: #{tpu_custom_call.1} parent=1 // loop_pre_header
      _
    $region3: #{tpu_custom_call.1} parent=1 // loop_header
      %s15 = sphi 0, %s19
      %p16 = scmp.ge.s32.totalorder %s15, 4
      %s23 = sphi 0, %s23
      %s25 = sphi 0, %s23
      %s26 = sphi 0, %s25
      %s40 = sphi 0, %s26
      %s46 = sphi 0, %s48
      %s49 = sphi 0, %s46
      %s50 = sphi 0, %s49
      %s66 = sphi 0, %s50
      %s72 = sphi 0, %s74
      %s75 = sphi 0, %s72
      %s76 = sphi 0, %s75
      %s92 = sphi 0, %s76
    $region4: #{tpu_custom_call.1} parent=1 // loop_header_branch
      %18 = sbr.rel (%p16) target = $region8
    $region5: #{tpu_custom_call.1} parent=1 // loop_body
      %s20 = ssub.s32 %s15, 1
      %s21 = ssub.s32 %s15, 2
      %s22 = sadd.s32 %s15, 1
      %s24 = sadd.s32 %s23, 1
      %p27 = scmp.eq.s32.totalorder %s15, 1
      %p28 = scmp.ne.s32.totalorder %s23, %s25
      %p29 = scmp.eq.s32.totalorder %s15, 0
      %p30 = por %p28, %p29
      %p31 = scmp.ne.s32.totalorder %s23, %s25
      %p32 = scmp.eq.s32.totalorder %s20, 1
      %p33 = por %p31, %p32
      %p34 = scmp.ne.s32.totalorder %s25, %s26
      %p35 = scmp.eq.s32.totalorder %s20, 0
      %p36 = por %p34, %p35
      %p37 = scmp.ne.s32.totalorder %s25, %s26
      %p38 = scmp.eq.s32.totalorder %s21, 1
      %p39 = por %p37, %p38
      %p41 = scmp.ne.s32.totalorder %s26, %s40
      %p42 = scmp.eq.s32.totalorder %s21, 0
      %p43 = por %p41, %p42
      %s44 = ssub.s32 %s15, %s22
      %p45 = scmp.eq.s32.totalorder %s44, 0
      %s47 = sadd.s32 %s46, 1
      %s48 = scalar_select %p45, %s46, %s47
      %p51 = pneg %p45
      %p52 = scmp.eq.s32.totalorder %s15, 1
      %p53 = por %p51, %p52
      %p54 = scmp.ne.s32.totalorder %s46, %s49
      %p55 = scmp.eq.s32.totalorder %s15, 0
      %p56 = por %p54, %p55
      %p57 = scmp.ne.s32.totalorder %s46, %s49
      %p58 = scmp.eq.s32.totalorder %s20, 1
      %p59 = por %p57, %p58
      %p60 = scmp.ne.s32.totalorder %s49, %s50
      %p61 = scmp.eq.s32.totalorder %s20, 0
      %p62 = por %p60, %p61
      %p63 = scmp.ne.s32.totalorder %s49, %s50
      %p64 = scmp.eq.s32.totalorder %s21, 1
      %p65 = por %p63, %p64
      %p67 = scmp.ne.s32.totalorder %s50, %s66
      %p68 = scmp.eq.s32.totalorder %s21, 0
      %p69 = por %p67, %p68
      %s70 = ssub.s32 %s15, %s22
      %p71 = scmp.eq.s32.totalorder %s70, 0
      %s73 = sadd.s32 %s72, 1
      %s74 = scalar_select %p71, %s72, %s73
      %p77 = pneg %p71
      %p78 = scmp.eq.s32.totalorder %s15, 1
      %p79 = por %p77, %p78
      %p80 = scmp.ne.s32.totalorder %s72, %s75
      %p81 = scmp.eq.s32.totalorder %s15, 0
      %p82 = por %p80, %p81
      %p83 = scmp.ne.s32.totalorder %s72, %s75
      %p84 = scmp.eq.s32.totalorder %s20, 1
      %p85 = por %p83, %p84
      %p86 = scmp.ne.s32.totalorder %s75, %s76
      %p87 = scmp.eq.s32.totalorder %s20, 0
      %p88 = por %p86, %p87
      %p89 = scmp.ne.s32.totalorder %s75, %s76
      %p90 = scmp.eq.s32.totalorder %s21, 1
      %p91 = por %p89, %p90
      %p93 = scmp.ne.s32.totalorder %s76, %s92
      %p94 = scmp.eq.s32.totalorder %s21, 0
      %p95 = por %p93, %p94
      %p96 = scmp.le.s32.totalorder 1, %s15
      %p97 = scmp.lt.s32.totalorder %s15, 3
      %p98 = pnand %p96, %p97
      %p99 = pneg %p98
      // Predicated region
      $region9: #{tpu_custom_call.1} parent=5 // pred_check
        _
      $region10: #{tpu_custom_call.1} parent=5 // pred_check_branch
        %101 = sbr.rel (%p98) target = $region12
      $region11: #{tpu_custom_call.1} parent=5 // pred_region
        %s102 = ssub.s32 %s15, 1
        // Predicated region
        $region13: #{tpu_custom_call.1} parent=11 // pred_check
          %p103 = pneg %p36
        $region14: #{tpu_custom_call.1} parent=11 // pred_check_branch
          %105 = sbr.rel (%p103) target = $region16
        $region15: #{tpu_custom_call.1} parent=11 // pred_region
          %107 = vsyncadd [#allocation3], 0
          %s108 = sshll.u32 %s0, 4
          %s109 = int_to_ptr.hbm [resolvable:$true] %s108
          %s110 = sshll.u32 [#allocation2], 4
          %s111 = int_to_ptr.vmem [resolvable:$true] %s110
          %116 = dma.hbm_to_vmem [thread:$0]  %s109, 3136, %s111, [#allocation3], 64, 64, 4
        $region16: #{tpu_custom_call.1} parent=11 // pred_fallthru
          _
      $region12: #{tpu_custom_call.1} parent=5 // pred_fallthru
        _
      %p117 = scmp.lt.s32.totalorder %s15, 2
      // Predicated region
      $region17: #{tpu_custom_call.1} parent=5 // pred_check
        %p118 = pneg %p117
      $region18: #{tpu_custom_call.1} parent=5 // pred_check_branch
        %120 = sbr.rel (%p118) target = $region20
      $region19: #{tpu_custom_call.1} parent=5 // pred_region
        // Predicated region
        $region21: #{tpu_custom_call.1} parent=19 // pred_check
          %p121 = pneg %p56
        $region22: #{tpu_custom_call.1} parent=19 // pred_check_branch
          %123 = sbr.rel (%p121) target = $region24
        $region23: #{tpu_custom_call.1} parent=19 // pred_region
          %s124 = sand.u32 %s46, 1
          %s125 = scalar_lea.sflag [#allocation6], %s124
          %s126 = sand.u32 %s46, 1
          %s127 = smul.addr %s126, 8
          %s128 = scalar_lea.vmem [#allocation5], %s127
          %130 = vsyncadd %s125, 0
          %s131 = smul.addr %s15, 2
          %s132 = smul.addr %s131, 4
          %s133 = scalar_lea.hbm %s1, %s132
          %s135 = sshll.u32 %s133, 4
          %s136 = int_to_ptr.hbm [resolvable:$true] %s135
          %s137 = sshll.u32 %s128, 4
          %s138 = int_to_ptr.vmem [resolvable:$true] %s137
          %140 = dma.hbm_to_vmem [thread:$0]  %s136, 128, %s138, %s125
        $region24: #{tpu_custom_call.1} parent=19 // pred_fallthru
          _
      $region20: #{tpu_custom_call.1} parent=5 // pred_fallthru
        _
      %p141 = scmp.le.s32.totalorder 1, %s15
      %p142 = scmp.lt.s32.totalorder %s15, 3
      %p143 = pnand %p141, %p142
      %p144 = pneg %p143
      // Predicated region
      $region25: #{tpu_custom_call.1} parent=5 // pred_check
        _
      $region26: #{tpu_custom_call.1} parent=5 // pred_check_branch
        %146 = sbr.rel (%p143) target = $region28
      $region27: #{tpu_custom_call.1} parent=5 // pred_region
        %s147 = ssub.s32 %s15, 1
        // Predicated region
        $region29: #{tpu_custom_call.1} parent=27 // pred_check
          %p148 = pneg %p36
        $region30: #{tpu_custom_call.1} parent=27 // pred_check_branch
          %150 = sbr.rel (%p148) target = $region32
        $region31: #{tpu_custom_call.1} parent=27 // pred_region
          %152 = dma.done [#allocation3], 3136
        $region32: #{tpu_custom_call.1} parent=27 // pred_fallthru
          _
        %s153 = sand.u32 %s49, 1
        %s154 = scalar_lea.sflag [#allocation6], %s153
        %s155 = sand.u32 %s49, 1
        %s156 = smul.addr %s155, 8
        %s157 = scalar_lea.vmem [#allocation5], %s156
        // Predicated region
        $region33: #{tpu_custom_call.1} parent=27 // pred_check
          %p158 = pneg %p62
        $region34: #{tpu_custom_call.1} parent=27 // pred_check_branch
          %160 = sbr.rel (%p158) target = $region36
        $region35: #{tpu_custom_call.1} parent=27 // pred_region
          %162 = dma.done %s154, 128
        $region36: #{tpu_custom_call.1} parent=27 // pred_fallthru
          _
        %p163 = pneg %p36
        %p164 = pneg %p33
        %s165 = sand.u32 %s49, 1
        %s166 = scalar_lea.sflag [#allocation6], %s165
        %s167 = sand.u32 %s49, 1
        %s168 = smul.addr %s167, 8
        %s169 = scalar_lea.vmem [#allocation5], %s168
        %p170 = pneg %p62
        %p171 = pneg %p59
        %p172 = pneg %p88
        %p173 = pneg %p85
        %s174 = sand.u32 %s75, 1
        %s175 = scalar_lea.sflag [#allocation4], %s174
        %s176 = sand.u32 %s75, 1
        %s177 = smul.addr %s176, 8
        %s178 = scalar_lea.vmem [#allocation7], %s177
        %v179 = vld [vmem:[%s157] sm:$0xff]
        %181 = vst [vmem:[#allocation1] ss:$2 sm:$0xff] %v179
        %v182 = vld.sshfl [vmem:[#allocation1] sm:$0xff pattern:$0x75316420]
        %v183 = vld.sshfl [vmem:[#allocation1 + $0x8] sm:$0xff pattern:$0x75316420]
        %vm186 = vcmask 1043456
        %v187 = vsel %vm186, %v182, 0.0
        %v188 = vrot.slane %v187, 4
        %v189 = vadd.f32 %v187, %v188
        %v190 = vrot.slane %v189, 2
        %v191 = vadd.f32 %v189, %v190
        %v192 = vrot.slane %v191, 1
        %v193 = vadd.f32 %v191, %v192
        %v194 = vsel %vm186, %v183, 0.0
        %v195 = vrot.slane %v194, 4
        %v196 = vadd.f32 %v194, %v195
        %v197 = vrot.slane %v196, 2
        %v198 = vadd.f32 %v196, %v197
        %v199 = vrot.slane %v198, 1
        %v200 = vadd.f32 %v198, %v199
        %201 = vst [vmem:[#allocation1] ss:$2 sm:$0xff] %v179
        %v202 = vld.sshfl [vmem:[#allocation1] sm:$0xff pattern:$0x75316420]
        %v203 = vld.sshfl [vmem:[#allocation1 + $0x8] sm:$0xff pattern:$0x75316420]
        %v206 = vsel %vm186, %v202, -inf
        %v207 = vrot.slane %v206, 4
        %v208 = vmax.f32 %v206, %v207
        %v209 = vrot.slane %v208, 2
        %v210 = vmax.f32 %v208, %v209
        %v211 = vrot.slane %v210, 1
        %v212 = vmax.f32 %v210, %v211
        %v213 = vsel %vm186, %v203, -inf
        %v214 = vrot.slane %v213, 4
        %v215 = vmax.f32 %v213, %v214
        %v216 = vrot.slane %v215, 2
        %v217 = vmax.f32 %v215, %v216
        %v218 = vrot.slane %v217, 1
        %v219 = vmax.f32 %v217, %v218
        %vm220 = vcmask 1040384
        %v221 = vsel %vm220, %v193, %v212
        %v222 = vsel %vm220, %v200, %v219
        %223 = vrot.lane.b32.xlu0 %v221, 51
        %v224 = vpop.permute.xlu0 %223
        %225 = vrot.lane.b32.xlu0 %v222, 51
        %v226 = vpop.permute.xlu0 %225
        %v227 = vlaneseq
        %v228 = vand.u32 %v227, 127
        %vm229 = vcmp.lt.s32.totalorder %v228, 51
        %v230 = vsel %vm229, %v224, %v226
        %v231 = vsel %vm229, %v226, %v224
        %v232 = vld [vmem:[#allocation2] sm:$0xf]
        %234 = vst [vmem:[#allocation1] ss:$4 sm:$0xff] %v232
        %v235 = vld.sshfl [vmem:[#allocation1] sm:$0xff pattern:$0x73625140]
        %v236 = vld.sshfl [vmem:[#allocation1 + $0x8] sm:$0xff pattern:$0x73625140]
        %v239 = vmul.f32 %v231, %v235
        %v240 = vmul.f32 %v230, %v236
        %v241 = vadd.f32 %v239, 0.0
        %v242 = vadd.f32 %v240, 0.0
        %243 = vrot.lane.b32.xlu0 %v221, 50
        %v244 = vpop.permute.xlu0 %243
        %245 = vrot.lane.b32.xlu0 %v222, 50
        %v246 = vpop.permute.xlu0 %245
        %vm247 = vcmp.lt.s32.totalorder %v228, 50
        %v248 = vsel %vm247, %v244, %v246
        %v249 = vsel %vm247, %v246, %v244
        %s250 = scalar_lea.vmem [#allocation2], 4
        %v251 = vld [vmem:[%s250] sm:$0xf]
        %253 = vst [vmem:[#allocation1] ss:$4 sm:$0xff] %v251
        %v254 = vld.sshfl [vmem:[#allocation1] sm:$0xff pattern:$0x73625140]
        %v255 = vld.sshfl [vmem:[#allocation1 + $0x8] sm:$0xff pattern:$0x73625140]
        %v258 = vmul.f32 %v249, %v254
        %v259 = vmul.f32 %v248, %v255
        %v260 = vadd.f32 %v258, 0.0
        %v261 = vadd.f32 %v259, 0.0
        %262 = vrot.lane.b32.xlu0 %v221, 49
        %v263 = vpop.permute.xlu0 %262
        %264 = vrot.lane.b32.xlu0 %v222, 49
        %v265 = vpop.permute.xlu0 %264
        %vm266 = vcmp.lt.s32.totalorder %v228, 49
        %v267 = vsel %vm266, %v263, %v265
        %v268 = vsel %vm266, %v265, %v263
        %s269 = scalar_lea.vmem [#allocation2], 8
        %v270 = vld [vmem:[%s269] sm:$0xf]
        %272 = vst [vmem:[#allocation1] ss:$4 sm:$0xff] %v270
        %v273 = vld.sshfl [vmem:[#allocation1] sm:$0xff pattern:$0x73625140]
        %v274 = vld.sshfl [vmem:[#allocation1 + $0x8] sm:$0xff pattern:$0x73625140]
        %v277 = vmul.f32 %v268, %v273
        %v278 = vmul.f32 %v267, %v274
        %v279 = vadd.f32 %v241, %v277
        %v280 = vadd.f32 %v242, %v278
        %281 = vrot.lane.b32.xlu0 %v221, 48
        %v282 = vpop.permute.xlu0 %281
        %283 = vrot.lane.b32.xlu0 %v222, 48
        %v284 = vpop.permute.xlu0 %283
        %vm285 = vcmp.lt.s32.totalorder %v228, 48
        %v286 = vsel %vm285, %v282, %v284
        %v287 = vsel %vm285, %v284, %v282
        %s288 = scalar_lea.vmem [#allocation2], 12
        %v289 = vld [vmem:[%s288] sm:$0xf]
        %291 = vst [vmem:[#allocation1] ss:$4 sm:$0xff] %v289
        %v292 = vld.sshfl [vmem:[#allocation1] sm:$0xff pattern:$0x73625140]
        %v293 = vld.sshfl [vmem:[#allocation1 + $0x8] sm:$0xff pattern:$0x73625140]
        %v296 = vmul.f32 %v287, %v292
        %v297 = vmul.f32 %v286, %v293
        %v298 = vadd.f32 %v260, %v296
        %v299 = vadd.f32 %v261, %v297
        %300 = vrot.lane.b32.xlu0 %v221, 47
        %v301 = vpop.permute.xlu0 %300
        %302 = vrot.lane.b32.xlu0 %v222, 47
        %v303 = vpop.permute.xlu0 %302
        %vm304 = vcmp.lt.s32.totalorder %v228, 47
        %v305 = vsel %vm304, %v301, %v303
        %v306 = vsel %vm304, %v303, %v301
        %s307 = scalar_lea.vmem [#allocation2], 16
        %v308 = vld [vmem:[%s307] sm:$0xf]
        %310 = vst [vmem:[#allocation1] ss:$4 sm:$0xff] %v308
        %v311 = vld.sshfl [vmem:[#allocation1] sm:$0xff pattern:$0x73625140]
        %v312 = vld.sshfl [vmem:[#allocation1 + $0x8] sm:$0xff pattern:$0x73625140]
        %v315 = vmul.f32 %v306, %v311
        %v316 = vmul.f32 %v305, %v312
        %v317 = vadd.f32 %v279, %v315
        %v318 = vadd.f32 %v280, %v316
        %319 = vrot.lane.b32.xlu0 %v221, 46
        %v320 = vpop.permute.xlu0 %319
        %321 = vrot.lane.b32.xlu0 %v222, 46
        %v322 = vpop.permute.xlu0 %321
        %vm323 = vcmp.lt.s32.totalorder %v228, 46
        %v324 = vsel %vm323, %v320, %v322
        %v325 = vsel %vm323, %v322, %v320
        %s326 = scalar_lea.vmem [#allocation2], 20
        %v327 = vld [vmem:[%s326] sm:$0xf]
        %329 = vst [vmem:[#allocation1] ss:$4 sm:$0xff] %v327
        %v330 = vld.sshfl [vmem:[#allocation1] sm:$0xff pattern:$0x73625140]
        %v331 = vld.sshfl [vmem:[#allocation1 + $0x8] sm:$0xff pattern:$0x73625140]
        %v334 = vmul.f32 %v325, %v330
        %v335 = vmul.f32 %v324, %v331
        %v336 = vadd.f32 %v298, %v334
        %v337 = vadd.f32 %v299, %v335
        %338 = vrot.lane.b32.xlu0 %v221, 45
        %v339 = vpop.permute.xlu0 %338
        %340 = vrot.lane.b32.xlu0 %v222, 45
        %v341 = vpop.permute.xlu0 %340
        %vm342 = vcmp.lt.s32.totalorder %v228, 45
        %v343 = vsel %vm342, %v339, %v341
        %v344 = vsel %vm342, %v341, %v339
        %s345 = scalar_lea.vmem [#allocation2], 24
        %v346 = vld [vmem:[%s345] sm:$0xf]
        %348 = vst [vmem:[#allocation1] ss:$4 sm:$0xff] %v346
        %v349 = vld.sshfl [vmem:[#allocation1] sm:$0xff pattern:$0x73625140]
        %v350 = vld.sshfl [vmem:[#allocation1 + $0x8] sm:$0xff pattern:$0x73625140]
        %v353 = vmul.f32 %v344, %v349
        %v354 = vmul.f32 %v343, %v350
        %v355 = vadd.f32 %v317, %v353
        %v356 = vadd.f32 %v318, %v354
        %357 = vrot.lane.b32.xlu0 %v221, 35
        %v358 = vpop.permute.xlu0 %357
        %359 = vrot.lane.b32.xlu0 %v222, 35
        %v360 = vpop.permute.xlu0 %359
        %vm361 = vcmp.lt.s32.totalorder %v228, 35
        %v362 = vsel %vm361, %v358, %v360
        %v363 = vsel %vm361, %v360, %v358
        %s364 = scalar_lea.vmem [#allocation2], 28
        %v365 = vld [vmem:[%s364] sm:$0xf]
        %367 = vst [vmem:[#allocation1] ss:$4 sm:$0xff] %v365
        %v368 = vld.sshfl [vmem:[#allocation1] sm:$0xff pattern:$0x73625140]
        %v369 = vld.sshfl [vmem:[#allocation1 + $0x8] sm:$0xff pattern:$0x73625140]
        %v372 = vmul.f32 %v363, %v368
        %v373 = vmul.f32 %v362, %v369
        %v374 = vadd.f32 %v336, %v372
        %v375 = vadd.f32 %v337, %v373
        %376 = vrot.lane.b32.xlu0 %v221, 34
        %v377 = vpop.permute.xlu0 %376
        %378 = vrot.lane.b32.xlu0 %v222, 34
        %v379 = vpop.permute.xlu0 %378
        %vm380 = vcmp.lt.s32.totalorder %v228, 34
        %v381 = vsel %vm380, %v377, %v379
        %v382 = vsel %vm380, %v379, %v377
        %s383 = scalar_lea.vmem [#allocation2], 32
        %v384 = vld [vmem:[%s383] sm:$0xf]
        %386 = vst [vmem:[#allocation1] ss:$4 sm:$0xff] %v384
        %v387 = vld.sshfl [vmem:[#allocation1] sm:$0xff pattern:$0x73625140]
        %v388 = vld.sshfl [vmem:[#allocation1 + $0x8] sm:$0xff pattern:$0x73625140]
        %v391 = vmul.f32 %v382, %v387
        %v392 = vmul.f32 %v381, %v388
        %v393 = vadd.f32 %v355, %v391
        %v394 = vadd.f32 %v356, %v392
        %395 = vrot.lane.b32.xlu0 %v221, 33
        %v396 = vpop.permute.xlu0 %395
        %397 = vrot.lane.b32.xlu0 %v222, 33
        %v398 = vpop.permute.xlu0 %397
        %vm399 = vcmp.lt.s32.totalorder %v228, 33
        %v400 = vsel %vm399, %v396, %v398
        %v401 = vsel %vm399, %v398, %v396
        %s402 = scalar_lea.vmem [#allocation2], 36
        %v403 = vld [vmem:[%s402] sm:$0xf]
        %405 = vst [vmem:[#allocation1] ss:$4 sm:$0xff] %v403
        %v406 = vld.sshfl [vmem:[#allocation1] sm:$0xff pattern:$0x73625140]
        %v407 = vld.sshfl [vmem:[#allocation1 + $0x8] sm:$0xff pattern:$0x73625140]
        %v410 = vmul.f32 %v401, %v406
        %v411 = vmul.f32 %v400, %v407
        %v412 = vadd.f32 %v374, %v410
        %v413 = vadd.f32 %v375, %v411
        %414 = vrot.lane.b32.xlu0 %v221, 32
        %v415 = vpop.permute.xlu0 %414
        %416 = vrot.lane.b32.xlu0 %v222, 32
        %v417 = vpop.permute.xlu0 %416
        %vm418 = vcmp.lt.s32.totalorder %v228, 32
        %v419 = vsel %vm418, %v415, %v417
        %v420 = vsel %vm418, %v417, %v415
        %s421 = scalar_lea.vmem [#allocation2], 40
        %v422 = vld [vmem:[%s421] sm:$0xf]
        %424 = vst [vmem:[#allocation1] ss:$4 sm:$0xff] %v422
        %v425 = vld.sshfl [vmem:[#allocation1] sm:$0xff pattern:$0x73625140]
        %v426 = vld.sshfl [vmem:[#allocation1 + $0x8] sm:$0xff pattern:$0x73625140]
        %v429 = vmul.f32 %v420, %v425
        %v430 = vmul.f32 %v419, %v426
        %v431 = vadd.f32 %v393, %v429
        %v432 = vadd.f32 %v394, %v430
        %433 = vrot.lane.b32.xlu0 %v221, 31
        %v434 = vpop.permute.xlu0 %433
        %435 = vrot.lane.b32.xlu0 %v222, 31
        %v436 = vpop.permute.xlu0 %435
        %vm437 = vcmp.lt.s32.totalorder %v228, 31
        %v438 = vsel %vm437, %v434, %v436
        %v439 = vsel %vm437, %v436, %v434
        %s440 = scalar_lea.vmem [#allocation2], 44
        %v441 = vld [vmem:[%s440] sm:$0xf]
        %443 = vst [vmem:[#allocation1] ss:$4 sm:$0xff] %v441
        %v444 = vld.sshfl [vmem:[#allocation1] sm:$0xff pattern:$0x73625140]
        %v445 = vld.sshfl [vmem:[#allocation1 + $0x8] sm:$0xff pattern:$0x73625140]
        %v448 = vmul.f32 %v439, %v444
        %v449 = vmul.f32 %v438, %v445
        %v450 = vadd.f32 %v412, %v448
        %v451 = vadd.f32 %v413, %v449
        %452 = vrot.lane.b32.xlu0 %v221, 30
        %v453 = vpop.permute.xlu0 %452
        %454 = vrot.lane.b32.xlu0 %v222, 30
        %v455 = vpop.permute.xlu0 %454
        %vm456 = vcmp.lt.s32.totalorder %v228, 30
        %v457 = vsel %vm456, %v453, %v455
        %v458 = vsel %vm456, %v455, %v453
        %s459 = scalar_lea.vmem [#allocation2], 48
        %v460 = vld [vmem:[%s459] sm:$0xf]
        %462 = vst [vmem:[#allocation1] ss:$4 sm:$0xff] %v460
        %v463 = vld.sshfl [vmem:[#allocation1] sm:$0xff pattern:$0x73625140]
        %v464 = vld.sshfl [vmem:[#allocation1 + $0x8] sm:$0xff pattern:$0x73625140]
        %v467 = vmul.f32 %v458, %v463
        %v468 = vmul.f32 %v457, %v464
        %v469 = vadd.f32 %v431, %v467
        %v470 = vadd.f32 %v432, %v468
        %471 = vrot.lane.b32.xlu0 %v221, 29
        %v472 = vpop.permute.xlu0 %471
        %473 = vrot.lane.b32.xlu0 %v222, 29
        %v474 = vpop.permute.xlu0 %473
        %vm475 = vcmp.lt.s32.totalorder %v228, 29
        %v476 = vsel %vm475, %v472, %v474
        %v477 = vsel %vm475, %v474, %v472
        %s478 = scalar_lea.vmem [#allocation2], 52
        %v479 = vld [vmem:[%s478] sm:$0xf]
        %481 = vst [vmem:[#allocation1] ss:$4 sm:$0xff] %v479
        %v482 = vld.sshfl [vmem:[#allocation1] sm:$0xff pattern:$0x73625140]
        %v483 = vld.sshfl [vmem:[#allocation1 + $0x8] sm:$0xff pattern:$0x73625140]
        %v486 = vmul.f32 %v477, %v482
        %v487 = vmul.f32 %v476, %v483
        %v488 = vadd.f32 %v450, %v486
        %v489 = vadd.f32 %v451, %v487
        %490 = vrot.lane.b32.xlu0 %v221, 19
        %v491 = vpop.permute.xlu0 %490
        %492 = vrot.lane.b32.xlu0 %v222, 19
        %v493 = vpop.permute.xlu0 %492
        %vm494 = vcmp.lt.s32.totalorder %v228, 19
        %v495 = vsel %vm494, %v491, %v493
        %v496 = vsel %vm494, %v493, %v491
        %s497 = scalar_lea.vmem [#allocation2], 56
        %v498 = vld [vmem:[%s497] sm:$0xf]
        %500 = vst [vmem:[#allocation1] ss:$4 sm:$0xff] %v498
        %v501 = vld.sshfl [vmem:[#allocation1] sm:$0xff pattern:$0x73625140]
        %v502 = vld.sshfl [vmem:[#allocation1 + $0x8] sm:$0xff pattern:$0x73625140]
        %v505 = vmul.f32 %v496, %v501
        %v506 = vmul.f32 %v495, %v502
        %v507 = vadd.f32 %v469, %v505
        %v508 = vadd.f32 %v470, %v506
        %509 = vrot.lane.b32.xlu0 %v221, 18
        %v510 = vpop.permute.xlu0 %509
        %511 = vrot.lane.b32.xlu0 %v222, 18
        %v512 = vpop.permute.xlu0 %511
        %vm513 = vcmp.lt.s32.totalorder %v228, 18
        %v514 = vsel %vm513, %v510, %v512
        %v515 = vsel %vm513, %v512, %v510
        %s516 = scalar_lea.vmem [#allocation2], 60
        %v517 = vld [vmem:[%s516] sm:$0xf]
        %519 = vst [vmem:[#allocation1] ss:$4 sm:$0xff] %v517
        %v520 = vld.sshfl [vmem:[#allocation1] sm:$0xff pattern:$0x73625140]
        %v521 = vld.sshfl [vmem:[#allocation1 + $0x8] sm:$0xff pattern:$0x73625140]
        %v524 = vmul.f32 %v515, %v520
        %v525 = vmul.f32 %v514, %v521
        %v526 = vadd.f32 %v488, %v524
        %v527 = vadd.f32 %v489, %v525
        %528 = vrot.lane.b32.xlu0 %v221, 17
        %v529 = vpop.permute.xlu0 %528
        %530 = vrot.lane.b32.xlu0 %v222, 17
        %v531 = vpop.permute.xlu0 %530
        %vm532 = vcmp.lt.s32.totalorder %v228, 17
        %v533 = vsel %vm532, %v529, %v531
        %v534 = vsel %vm532, %v531, %v529
        %s535 = scalar_lea.vmem [#allocation2], 64
        %v536 = vld [vmem:[%s535] sm:$0xf]
        %538 = vst [vmem:[#allocation1] ss:$4 sm:$0xff] %v536
        %v539 = vld.sshfl [vmem:[#allocation1] sm:$0xff pattern:$0x73625140]
        %v540 = vld.sshfl [vmem:[#allocation1 + $0x8] sm:$0xff pattern:$0x73625140]
        %v543 = vmul.f32 %v534, %v539
        %v544 = vmul.f32 %v533, %v540
        %v545 = vadd.f32 %v507, %v543
        %v546 = vadd.f32 %v508, %v544
        %547 = vrot.lane.b32.xlu0 %v221, 16
        %v548 = vpop.permute.xlu0 %547
        %549 = vrot.lane.b32.xlu0 %v222, 16
        %v550 = vpop.permute.xlu0 %549
        %vm551 = vcmp.lt.s32.totalorder %v228, 16
        %v552 = vsel %vm551, %v548, %v550
        %v553 = vsel %vm551, %v550, %v548
        %s554 = scalar_lea.vmem [#allocation2], 68
        %v555 = vld [vmem:[%s554] sm:$0xf]
        %557 = vst [vmem:[#allocation1] ss:$4 sm:$0xff] %v555
        %v558 = vld.sshfl [vmem:[#allocation1] sm:$0xff pattern:$0x73625140]
        %v559 = vld.sshfl [vmem:[#allocation1 + $0x8] sm:$0xff pattern:$0x73625140]
        %v562 = vmul.f32 %v553, %v558
        %v563 = vmul.f32 %v552, %v559
        %v564 = vadd.f32 %v526, %v562
        %v565 = vadd.f32 %v527, %v563
        %566 = vrot.lane.b32.xlu0 %v221, 15
        %v567 = vpop.permute.xlu0 %566
        %568 = vrot.lane.b32.xlu0 %v222, 15
        %v569 = vpop.permute.xlu0 %568
        %vm570 = vcmp.lt.s32.totalorder %v228, 15
        %v571 = vsel %vm570, %v567, %v569
        %v572 = vsel %vm570, %v569, %v567
        %s573 = scalar_lea.vmem [#allocation2], 72
        %v574 = vld [vmem:[%s573] sm:$0xf]
        %576 = vst [vmem:[#allocation1] ss:$4 sm:$0xff] %v574
        %v577 = vld.sshfl [vmem:[#allocation1] sm:$0xff pattern:$0x73625140]
        %v578 = vld.sshfl [vmem:[#allocation1 + $0x8] sm:$0xff pattern:$0x73625140]
        %v581 = vmul.f32 %v572, %v577
        %v582 = vmul.f32 %v571, %v578
        %v583 = vadd.f32 %v545, %v581
        %v584 = vadd.f32 %v546, %v582
        %585 = vrot.lane.b32.xlu0 %v221, 14
        %v586 = vpop.permute.xlu0 %585
        %587 = vrot.lane.b32.xlu0 %v222, 14
        %v588 = vpop.permute.xlu0 %587
        %vm589 = vcmp.lt.s32.totalorder %v228, 14
        %v590 = vsel %vm589, %v586, %v588
        %v591 = vsel %vm589, %v588, %v586
        %s592 = scalar_lea.vmem [#allocation2], 76
        %v593 = vld [vmem:[%s592] sm:$0xf]
        %595 = vst [vmem:[#allocation1] ss:$4 sm:$0xff] %v593
        %v596 = vld.sshfl [vmem:[#allocation1] sm:$0xff pattern:$0x73625140]
        %v597 = vld.sshfl [vmem:[#allocation1 + $0x8] sm:$0xff pattern:$0x73625140]
        %v600 = vmul.f32 %v591, %v596
        %v601 = vmul.f32 %v590, %v597
        %v602 = vadd.f32 %v564, %v600
        %v603 = vadd.f32 %v565, %v601
        %604 = vrot.lane.b32.xlu0 %v221, 13
        %v605 = vpop.permute.xlu0 %604
        %606 = vrot.lane.b32.xlu0 %v222, 13
        %v607 = vpop.permute.xlu0 %606
        %vm608 = vcmp.lt.s32.totalorder %v228, 13
        %v609 = vsel %vm608, %v605, %v607
        %v610 = vsel %vm608, %v607, %v605
        %s611 = scalar_lea.vmem [#allocation2], 80
        %v612 = vld [vmem:[%s611] sm:$0xf]
        %614 = vst [vmem:[#allocation1] ss:$4 sm:$0xff] %v612
        %v615 = vld.sshfl [vmem:[#allocation1] sm:$0xff pattern:$0x73625140]
        %v616 = vld.sshfl [vmem:[#allocation1 + $0x8] sm:$0xff pattern:$0x73625140]
        %v619 = vmul.f32 %v610, %v615
        %v620 = vmul.f32 %v609, %v616
        %v621 = vadd.f32 %v583, %v619
        %v622 = vadd.f32 %v584, %v620
        %623 = vrot.lane.b32.xlu0 %v221, 3
        %v624 = vpop.permute.xlu0 %623
        %625 = vrot.lane.b32.xlu0 %v222, 3
        %v626 = vpop.permute.xlu0 %625
        %vm627 = vcmp.lt.s32.totalorder %v228, 3
        %v628 = vsel %vm627, %v624, %v626
        %v629 = vsel %vm627, %v626, %v624
        %s630 = scalar_lea.vmem [#allocation2], 84
        %v631 = vld [vmem:[%s630] sm:$0xf]
        %633 = vst [vmem:[#allocation1] ss:$4 sm:$0xff] %v631
        %v634 = vld.sshfl [vmem:[#allocation1] sm:$0xff pattern:$0x73625140]
        %v635 = vld.sshfl [vmem:[#allocation1 + $0x8] sm:$0xff pattern:$0x73625140]
        %v638 = vmul.f32 %v629, %v634
        %v639 = vmul.f32 %v628, %v635
        %v640 = vadd.f32 %v602, %v638
        %v641 = vadd.f32 %v603, %v639
        %642 = vrot.lane.b32.xlu0 %v221, 2
        %v643 = vpop.permute.xlu0 %642
        %644 = vrot.lane.b32.xlu0 %v222, 2
        %v645 = vpop.permute.xlu0 %644
        %vm646 = vcmp.lt.s32.totalorder %v228, 2
        %v647 = vsel %vm646, %v643, %v645
        %v648 = vsel %vm646, %v645, %v643
        %s649 = scalar_lea.vmem [#allocation2], 88
        %v650 = vld [vmem:[%s649] sm:$0xf]
        %652 = vst [vmem:[#allocation1] ss:$4 sm:$0xff] %v650
        %v653 = vld.sshfl [vmem:[#allocation1] sm:$0xff pattern:$0x73625140]
        %v654 = vld.sshfl [vmem:[#allocation1 + $0x8] sm:$0xff pattern:$0x73625140]
        %v657 = vmul.f32 %v648, %v653
        %v658 = vmul.f32 %v647, %v654
        %v659 = vadd.f32 %v621, %v657
        %v660 = vadd.f32 %v622, %v658
        %661 = vrot.lane.b32.xlu0 %v221, 1
        %v662 = vpop.permute.xlu0 %661
        %663 = vrot.lane.b32.xlu0 %v222, 1
        %v664 = vpop.permute.xlu0 %663
        %vm665 = vcmp.lt.s32.totalorder %v228, 1
        %v666 = vsel %vm665, %v662, %v664
        %v667 = vsel %vm665, %v664, %v662
        %s668 = scalar_lea.vmem [#allocation2], 92
        %v669 = vld [vmem:[%s668] sm:$0xf]
        %671 = vst [vmem:[#allocation1] ss:$4 sm:$0xff] %v669
        %v672 = vld.sshfl [vmem:[#allocation1] sm:$0xff pattern:$0x73625140]
        %v673 = vld.sshfl [vmem:[#allocation1 + $0x8] sm:$0xff pattern:$0x73625140]
        %v676 = vmul.f32 %v667, %v672
        %v677 = vmul.f32 %v666, %v673
        %v678 = vadd.f32 %v640, %v676
        %v679 = vadd.f32 %v641, %v677
        %s680 = scalar_lea.vmem [#allocation2], 96
        %v681 = vld [vmem:[%s680] sm:$0xf]
        %683 = vst [vmem:[#allocation1] ss:$4 sm:$0xff] %v681
        %v684 = vld.sshfl [vmem:[#allocation1] sm:$0xff pattern:$0x73625140]
        %v685 = vld.sshfl [vmem:[#allocation1 + $0x8] sm:$0xff pattern:$0x73625140]
        %v688 = vmul.f32 %v221, %v684
        %v689 = vmul.f32 %v222, %v685
        %v690 = vadd.f32 %v659, %v688
        %v691 = vadd.f32 %v660, %v689
        %692 = vrot.lane.b32.xlu0 %v221, 127
        %v693 = vpop.permute.xlu0 %692
        %694 = vrot.lane.b32.xlu0 %v222, 127
        %v695 = vpop.permute.xlu0 %694
        %vm696 = vcmp.lt.s32.totalorder %v228, 127
        %v697 = vsel %vm696, %v693, %v695
        %v698 = vsel %vm696, %v695, %v693
        %s699 = scalar_lea.vmem [#allocation2], 100
        %v700 = vld [vmem:[%s699] sm:$0xf]
        %702 = vst [vmem:[#allocation1] ss:$4 sm:$0xff] %v700
        %v703 = vld.sshfl [vmem:[#allocation1] sm:$0xff pattern:$0x73625140]
        %v704 = vld.sshfl [vmem:[#allocation1 + $0x8] sm:$0xff pattern:$0x73625140]
        %v707 = vmul.f32 %v697, %v703
        %v708 = vmul.f32 %v698, %v704
        %v709 = vadd.f32 %v678, %v707
        %v710 = vadd.f32 %v679, %v708
        %711 = vrot.lane.b32.xlu0 %v221, 126
        %v712 = vpop.permute.xlu0 %711
        %713 = vrot.lane.b32.xlu0 %v222, 126
        %v714 = vpop.permute.xlu0 %713
        %vm715 = vcmp.lt.s32.totalorder %v228, 126
        %v716 = vsel %vm715, %v712, %v714
        %v717 = vsel %vm715, %v714, %v712
        %s718 = scalar_lea.vmem [#allocation2], 104
        %v719 = vld [vmem:[%s718] sm:$0xf]
        %721 = vst [vmem:[#allocation1] ss:$4 sm:$0xff] %v719
        %v722 = vld.sshfl [vmem:[#allocation1] sm:$0xff pattern:$0x73625140]
        %v723 = vld.sshfl [vmem:[#allocation1 + $0x8] sm:$0xff pattern:$0x73625140]
        %v726 = vmul.f32 %v716, %v722
        %v727 = vmul.f32 %v717, %v723
        %v728 = vadd.f32 %v690, %v726
        %v729 = vadd.f32 %v691, %v727
        %730 = vrot.lane.b32.xlu0 %v221, 125
        %v731 = vpop.permute.xlu0 %730
        %732 = vrot.lane.b32.xlu0 %v222, 125
        %v733 = vpop.permute.xlu0 %732
        %vm734 = vcmp.lt.s32.totalorder %v228, 125
        %v735 = vsel %vm734, %v731, %v733
        %v736 = vsel %vm734, %v733, %v731
        %s737 = scalar_lea.vmem [#allocation2], 108
        %v738 = vld [vmem:[%s737] sm:$0xf]
        %740 = vst [vmem:[#allocation1] ss:$4 sm:$0xff] %v738
        %v741 = vld.sshfl [vmem:[#allocation1] sm:$0xff pattern:$0x73625140]
        %v742 = vld.sshfl [vmem:[#allocation1 + $0x8] sm:$0xff pattern:$0x73625140]
        %v745 = vmul.f32 %v735, %v741
        %v746 = vmul.f32 %v736, %v742
        %v747 = vadd.f32 %v709, %v745
        %v748 = vadd.f32 %v710, %v746
        %749 = vrot.lane.b32.xlu0 %v221, 115
        %v750 = vpop.permute.xlu0 %749
        %751 = vrot.lane.b32.xlu0 %v222, 115
        %v752 = vpop.permute.xlu0 %751
        %vm753 = vcmp.lt.s32.totalorder %v228, 115
        %v754 = vsel %vm753, %v750, %v752
        %v755 = vsel %vm753, %v752, %v750
        %s756 = scalar_lea.vmem [#allocation2], 112
        %v757 = vld [vmem:[%s756] sm:$0xf]
        %759 = vst [vmem:[#allocation1] ss:$4 sm:$0xff] %v757
        %v760 = vld.sshfl [vmem:[#allocation1] sm:$0xff pattern:$0x73625140]
        %v761 = vld.sshfl [vmem:[#allocation1 + $0x8] sm:$0xff pattern:$0x73625140]
        %v764 = vmul.f32 %v754, %v760
        %v765 = vmul.f32 %v755, %v761
        %v766 = vadd.f32 %v728, %v764
        %v767 = vadd.f32 %v729, %v765
        %768 = vrot.lane.b32.xlu0 %v221, 114
        %v769 = vpop.permute.xlu0 %768
        %770 = vrot.lane.b32.xlu0 %v222, 114
        %v771 = vpop.permute.xlu0 %770
        %vm772 = vcmp.lt.s32.totalorder %v228, 114
        %v773 = vsel %vm772, %v769, %v771
        %v774 = vsel %vm772, %v771, %v769
        %s775 = scalar_lea.vmem [#allocation2], 116
        %v776 = vld [vmem:[%s775] sm:$0xf]
        %778 = vst [vmem:[#allocation1] ss:$4 sm:$0xff] %v776
        %v779 = vld.sshfl [vmem:[#allocation1] sm:$0xff pattern:$0x73625140]
        %v780 = vld.sshfl [vmem:[#allocation1 + $0x8] sm:$0xff pattern:$0x73625140]
        %v783 = vmul.f32 %v773, %v779
        %v784 = vmul.f32 %v774, %v780
        %v785 = vadd.f32 %v747, %v783
        %v786 = vadd.f32 %v748, %v784
        %787 = vrot.lane.b32.xlu0 %v221, 113
        %v788 = vpop.permute.xlu0 %787
        %789 = vrot.lane.b32.xlu0 %v222, 113
        %v790 = vpop.permute.xlu0 %789
        %vm791 = vcmp.lt.s32.totalorder %v228, 113
        %v792 = vsel %vm791, %v788, %v790
        %v793 = vsel %vm791, %v790, %v788
        %s794 = scalar_lea.vmem [#allocation2], 120
        %v795 = vld [vmem:[%s794] sm:$0xf]
        %797 = vst [vmem:[#allocation1] ss:$4 sm:$0xff] %v795
        %v798 = vld.sshfl [vmem:[#allocation1] sm:$0xff pattern:$0x73625140]
        %v799 = vld.sshfl [vmem:[#allocation1 + $0x8] sm:$0xff pattern:$0x73625140]
        %v802 = vmul.f32 %v792, %v798
        %v803 = vmul.f32 %v793, %v799
        %v804 = vadd.f32 %v766, %v802
        %v805 = vadd.f32 %v767, %v803
        %806 = vrot.lane.b32.xlu0 %v221, 112
        %v807 = vpop.permute.xlu0 %806
        %808 = vrot.lane.b32.xlu0 %v222, 112
        %v809 = vpop.permute.xlu0 %808
        %vm810 = vcmp.lt.s32.totalorder %v228, 112
        %v811 = vsel %vm810, %v807, %v809
        %v812 = vsel %vm810, %v809, %v807
        %s813 = scalar_lea.vmem [#allocation2], 124
        %v814 = vld [vmem:[%s813] sm:$0xf]
        %816 = vst [vmem:[#allocation1] ss:$4 sm:$0xff] %v814
        %v817 = vld.sshfl [vmem:[#allocation1] sm:$0xff pattern:$0x73625140]
        %v818 = vld.sshfl [vmem:[#allocation1 + $0x8] sm:$0xff pattern:$0x73625140]
        %v821 = vmul.f32 %v811, %v817
        %v822 = vmul.f32 %v812, %v818
        %v823 = vadd.f32 %v785, %v821
        %v824 = vadd.f32 %v786, %v822
        %825 = vrot.lane.b32.xlu0 %v221, 111
        %v826 = vpop.permute.xlu0 %825
        %827 = vrot.lane.b32.xlu0 %v222, 111
        %v828 = vpop.permute.xlu0 %827
        %vm829 = vcmp.lt.s32.totalorder %v228, 111
        %v830 = vsel %vm829, %v826, %v828
        %v831 = vsel %vm829, %v828, %v826
        %s832 = scalar_lea.vmem [#allocation2], 128
        %v833 = vld [vmem:[%s832] sm:$0xf]
        %835 = vst [vmem:[#allocation1] ss:$4 sm:$0xff] %v833
        %v836 = vld.sshfl [vmem:[#allocation1] sm:$0xff pattern:$0x73625140]
        %v837 = vld.sshfl [vmem:[#allocation1 + $0x8] sm:$0xff pattern:$0x73625140]
        %v840 = vmul.f32 %v830, %v836
        %v841 = vmul.f32 %v831, %v837
        %v842 = vadd.f32 %v804, %v840
        %v843 = vadd.f32 %v805, %v841
        %844 = vrot.lane.b32.xlu0 %v221, 110
        %v845 = vpop.permute.xlu0 %844
        %846 = vrot.lane.b32.xlu0 %v222, 110
        %v847 = vpop.permute.xlu0 %846
        %vm848 = vcmp.lt.s32.totalorder %v228, 110
        %v849 = vsel %vm848, %v845, %v847
        %v850 = vsel %vm848, %v847, %v845
        %s851 = scalar_lea.vmem [#allocation2], 132
        %v852 = vld [vmem:[%s851] sm:$0xf]
        %854 = vst [vmem:[#allocation1] ss:$4 sm:$0xff] %v852
        %v855 = vld.sshfl [vmem:[#allocation1] sm:$0xff pattern:$0x73625140]
        %v856 = vld.sshfl [vmem:[#allocation1 + $0x8] sm:$0xff pattern:$0x73625140]
        %v859 = vmul.f32 %v849, %v855
        %v860 = vmul.f32 %v850, %v856
        %v861 = vadd.f32 %v823, %v859
        %v862 = vadd.f32 %v824, %v860
        %863 = vrot.lane.b32.xlu0 %v221, 109
        %v864 = vpop.permute.xlu0 %863
        %865 = vrot.lane.b32.xlu0 %v222, 109
        %v866 = vpop.permute.xlu0 %865
        %vm867 = vcmp.lt.s32.totalorder %v228, 109
        %v868 = vsel %vm867, %v864, %v866
        %v869 = vsel %vm867, %v866, %v864
        %s870 = scalar_lea.vmem [#allocation2], 136
        %v871 = vld [vmem:[%s870] sm:$0xf]
        %873 = vst [vmem:[#allocation1] ss:$4 sm:$0xff] %v871
        %v874 = vld.sshfl [vmem:[#allocation1] sm:$0xff pattern:$0x73625140]
        %v875 = vld.sshfl [vmem:[#allocation1 + $0x8] sm:$0xff pattern:$0x73625140]
        %v878 = vmul.f32 %v868, %v874
        %v879 = vmul.f32 %v869, %v875
        %v880 = vadd.f32 %v842, %v878
        %v881 = vadd.f32 %v843, %v879
        %882 = vrot.lane.b32.xlu0 %v221, 99
        %v883 = vpop.permute.xlu0 %882
        %884 = vrot.lane.b32.xlu0 %v222, 99
        %v885 = vpop.permute.xlu0 %884
        %vm886 = vcmp.lt.s32.totalorder %v228, 99
        %v887 = vsel %vm886, %v883, %v885
        %v888 = vsel %vm886, %v885, %v883
        %s889 = scalar_lea.vmem [#allocation2], 140
        %v890 = vld [vmem:[%s889] sm:$0xf]
        %892 = vst [vmem:[#allocation1] ss:$4 sm:$0xff] %v890
        %v893 = vld.sshfl [vmem:[#allocation1] sm:$0xff pattern:$0x73625140]
        %v894 = vld.sshfl [vmem:[#allocation1 + $0x8] sm:$0xff pattern:$0x73625140]
        %v897 = vmul.f32 %v887, %v893
        %v898 = vmul.f32 %v888, %v894
        %v899 = vadd.f32 %v861, %v897
        %v900 = vadd.f32 %v862, %v898
        %901 = vrot.lane.b32.xlu0 %v221, 98
        %v902 = vpop.permute.xlu0 %901
        %903 = vrot.lane.b32.xlu0 %v222, 98
        %v904 = vpop.permute.xlu0 %903
        %vm905 = vcmp.lt.s32.totalorder %v228, 98
        %v906 = vsel %vm905, %v902, %v904
        %v907 = vsel %vm905, %v904, %v902
        %s908 = scalar_lea.vmem [#allocation2], 144
        %v909 = vld [vmem:[%s908] sm:$0xf]
        %911 = vst [vmem:[#allocation1] ss:$4 sm:$0xff] %v909
        %v912 = vld.sshfl [vmem:[#allocation1] sm:$0xff pattern:$0x73625140]
        %v913 = vld.sshfl [vmem:[#allocation1 + $0x8] sm:$0xff pattern:$0x73625140]
        %v916 = vmul.f32 %v906, %v912
        %v917 = vmul.f32 %v907, %v913
        %v918 = vadd.f32 %v880, %v916
        %v919 = vadd.f32 %v881, %v917
        %920 = vrot.lane.b32.xlu0 %v221, 97
        %v921 = vpop.permute.xlu0 %920
        %922 = vrot.lane.b32.xlu0 %v222, 97
        %v923 = vpop.permute.xlu0 %922
        %vm924 = vcmp.lt.s32.totalorder %v228, 97
        %v925 = vsel %vm924, %v921, %v923
        %v926 = vsel %vm924, %v923, %v921
        %s927 = scalar_lea.vmem [#allocation2], 148
        %v928 = vld [vmem:[%s927] sm:$0xf]
        %930 = vst [vmem:[#allocation1] ss:$4 sm:$0xff] %v928
        %v931 = vld.sshfl [vmem:[#allocation1] sm:$0xff pattern:$0x73625140]
        %v932 = vld.sshfl [vmem:[#allocation1 + $0x8] sm:$0xff pattern:$0x73625140]
        %v935 = vmul.f32 %v925, %v931
        %v936 = vmul.f32 %v926, %v932
        %v937 = vadd.f32 %v899, %v935
        %v938 = vadd.f32 %v900, %v936
        %939 = vrot.lane.b32.xlu0 %v221, 96
        %v940 = vpop.permute.xlu0 %939
        %941 = vrot.lane.b32.xlu0 %v222, 96
        %v942 = vpop.permute.xlu0 %941
        %vm943 = vcmp.lt.s32.totalorder %v228, 96
        %v944 = vsel %vm943, %v940, %v942
        %v945 = vsel %vm943, %v942, %v940
        %s946 = scalar_lea.vmem [#allocation2], 152
        %v947 = vld [vmem:[%s946] sm:$0xf]
        %949 = vst [vmem:[#allocation1] ss:$4 sm:$0xff] %v947
        %v950 = vld.sshfl [vmem:[#allocation1] sm:$0xff pattern:$0x73625140]
        %v951 = vld.sshfl [vmem:[#allocation1 + $0x8] sm:$0xff pattern:$0x73625140]
        %v954 = vmul.f32 %v944, %v950
        %v955 = vmul.f32 %v945, %v951
        %v956 = vadd.f32 %v918, %v954
        %v957 = vadd.f32 %v919, %v955
        %958 = vrot.lane.b32.xlu0 %v221, 95
        %v959 = vpop.permute.xlu0 %958
        %960 = vrot.lane.b32.xlu0 %v222, 95
        %v961 = vpop.permute.xlu0 %960
        %vm962 = vcmp.lt.s32.totalorder %v228, 95
        %v963 = vsel %vm962, %v959, %v961
        %v964 = vsel %vm962, %v961, %v959
        %s965 = scalar_lea.vmem [#allocation2], 156
        %v966 = vld [vmem:[%s965] sm:$0xf]
        %968 = vst [vmem:[#allocation1] ss:$4 sm:$0xff] %v966
        %v969 = vld.sshfl [vmem:[#allocation1] sm:$0xff pattern:$0x73625140]
        %v970 = vld.sshfl [vmem:[#allocation1 + $0x8] sm:$0xff pattern:$0x73625140]
        %v973 = vmul.f32 %v963, %v969
        %v974 = vmul.f32 %v964, %v970
        %v975 = vadd.f32 %v937, %v973
        %v976 = vadd.f32 %v938, %v974
        %977 = vrot.lane.b32.xlu0 %v221, 94
        %v978 = vpop.permute.xlu0 %977
        %979 = vrot.lane.b32.xlu0 %v222, 94
        %v980 = vpop.permute.xlu0 %979
        %vm981 = vcmp.lt.s32.totalorder %v228, 94
        %v982 = vsel %vm981, %v978, %v980
        %v983 = vsel %vm981, %v980, %v978
        %s984 = scalar_lea.vmem [#allocation2], 160
        %v985 = vld [vmem:[%s984] sm:$0xf]
        %987 = vst [vmem:[#allocation1] ss:$4 sm:$0xff] %v985
        %v988 = vld.sshfl [vmem:[#allocation1] sm:$0xff pattern:$0x73625140]
        %v989 = vld.sshfl [vmem:[#allocation1 + $0x8] sm:$0xff pattern:$0x73625140]
        %v992 = vmul.f32 %v982, %v988
        %v993 = vmul.f32 %v983, %v989
        %v994 = vadd.f32 %v956, %v992
        %v995 = vadd.f32 %v957, %v993
        %996 = vrot.lane.b32.xlu0 %v221, 93
        %v997 = vpop.permute.xlu0 %996
        %998 = vrot.lane.b32.xlu0 %v222, 93
        %v999 = vpop.permute.xlu0 %998
        %vm1000 = vcmp.lt.s32.totalorder %v228, 93
        %v1001 = vsel %vm1000, %v997, %v999
        %v1002 = vsel %vm1000, %v999, %v997
        %s1003 = scalar_lea.vmem [#allocation2], 164
        %v1004 = vld [vmem:[%s1003] sm:$0xf]
        %1006 = vst [vmem:[#allocation1] ss:$4 sm:$0xff] %v1004
        %v1007 = vld.sshfl [vmem:[#allocation1] sm:$0xff pattern:$0x73625140]
        %v1008 = vld.sshfl [vmem:[#allocation1 + $0x8] sm:$0xff pattern:$0x73625140]
        %v1011 = vmul.f32 %v1001, %v1007
        %v1012 = vmul.f32 %v1002, %v1008
        %v1013 = vadd.f32 %v975, %v1011
        %v1014 = vadd.f32 %v976, %v1012
        %1015 = vrot.lane.b32.xlu0 %v221, 83
        %v1016 = vpop.permute.xlu0 %1015
        %1017 = vrot.lane.b32.xlu0 %v222, 83
        %v1018 = vpop.permute.xlu0 %1017
        %vm1019 = vcmp.lt.s32.totalorder %v228, 83
        %v1020 = vsel %vm1019, %v1016, %v1018
        %v1021 = vsel %vm1019, %v1018, %v1016
        %s1022 = scalar_lea.vmem [#allocation2], 168
        %v1023 = vld [vmem:[%s1022] sm:$0xf]
        %1025 = vst [vmem:[#allocation1] ss:$4 sm:$0xff] %v1023
        %v1026 = vld.sshfl [vmem:[#allocation1] sm:$0xff pattern:$0x73625140]
        %v1027 = vld.sshfl [vmem:[#allocation1 + $0x8] sm:$0xff pattern:$0x73625140]
        %v1030 = vmul.f32 %v1020, %v1026
        %v1031 = vmul.f32 %v1021, %v1027
        %v1032 = vadd.f32 %v994, %v1030
        %v1033 = vadd.f32 %v995, %v1031
        %1034 = vrot.lane.b32.xlu0 %v221, 82
        %v1035 = vpop.permute.xlu0 %1034
        %1036 = vrot.lane.b32.xlu0 %v222, 82
        %v1037 = vpop.permute.xlu0 %1036
        %vm1038 = vcmp.lt.s32.totalorder %v228, 82
        %v1039 = vsel %vm1038, %v1035, %v1037
        %v1040 = vsel %vm1038, %v1037, %v1035
        %s1041 = scalar_lea.vmem [#allocation2], 172
        %v1042 = vld [vmem:[%s1041] sm:$0xf]
        %1044 = vst [vmem:[#allocation1] ss:$4 sm:$0xff] %v1042
        %v1045 = vld.sshfl [vmem:[#allocation1] sm:$0xff pattern:$0x73625140]
        %v1046 = vld.sshfl [vmem:[#allocation1 + $0x8] sm:$0xff pattern:$0x73625140]
        %v1049 = vmul.f32 %v1039, %v1045
        %v1050 = vmul.f32 %v1040, %v1046
        %v1051 = vadd.f32 %v1013, %v1049
        %v1052 = vadd.f32 %v1014, %v1050
        %1053 = vrot.lane.b32.xlu0 %v221, 81
        %v1054 = vpop.permute.xlu0 %1053
        %1055 = vrot.lane.b32.xlu0 %v222, 81
        %v1056 = vpop.permute.xlu0 %1055
        %vm1057 = vcmp.lt.s32.totalorder %v228, 81
        %v1058 = vsel %vm1057, %v1054, %v1056
        %v1059 = vsel %vm1057, %v1056, %v1054
        %s1060 = scalar_lea.vmem [#allocation2], 176
        %v1061 = vld [vmem:[%s1060] sm:$0xf]
        %1063 = vst [vmem:[#allocation1] ss:$4 sm:$0xff] %v1061
        %v1064 = vld.sshfl [vmem:[#allocation1] sm:$0xff pattern:$0x73625140]
        %v1065 = vld.sshfl [vmem:[#allocation1 + $0x8] sm:$0xff pattern:$0x73625140]
        %v1068 = vmul.f32 %v1058, %v1064
        %v1069 = vmul.f32 %v1059, %v1065
        %v1070 = vadd.f32 %v1032, %v1068
        %v1071 = vadd.f32 %v1033, %v1069
        %1072 = vrot.lane.b32.xlu0 %v221, 80
        %v1073 = vpop.permute.xlu0 %1072
        %1074 = vrot.lane.b32.xlu0 %v222, 80
        %v1075 = vpop.permute.xlu0 %1074
        %vm1076 = vcmp.lt.s32.totalorder %v228, 80
        %v1077 = vsel %vm1076, %v1073, %v1075
        %v1078 = vsel %vm1076, %v1075, %v1073
        %s1079 = scalar_lea.vmem [#allocation2], 180
        %v1080 = vld [vmem:[%s1079] sm:$0xf]
        %1082 = vst [vmem:[#allocation1] ss:$4 sm:$0xff] %v1080
        %v1083 = vld.sshfl [vmem:[#allocation1] sm:$0xff pattern:$0x73625140]
        %v1084 = vld.sshfl [vmem:[#allocation1 + $0x8] sm:$0xff pattern:$0x73625140]
        %v1087 = vmul.f32 %v1077, %v1083
        %v1088 = vmul.f32 %v1078, %v1084
        %v1089 = vadd.f32 %v1051, %v1087
        %v1090 = vadd.f32 %v1052, %v1088
        %1091 = vrot.lane.b32.xlu0 %v221, 79
        %v1092 = vpop.permute.xlu0 %1091
        %1093 = vrot.lane.b32.xlu0 %v222, 79
        %v1094 = vpop.permute.xlu0 %1093
        %vm1095 = vcmp.lt.s32.totalorder %v228, 79
        %v1096 = vsel %vm1095, %v1092, %v1094
        %v1097 = vsel %vm1095, %v1094, %v1092
        %s1098 = scalar_lea.vmem [#allocation2], 184
        %v1099 = vld [vmem:[%s1098] sm:$0xf]
        %1101 = vst [vmem:[#allocation1] ss:$4 sm:$0xff] %v1099
        %v1102 = vld.sshfl [vmem:[#allocation1] sm:$0xff pattern:$0x73625140]
        %v1103 = vld.sshfl [vmem:[#allocation1 + $0x8] sm:$0xff pattern:$0x73625140]
        %v1106 = vmul.f32 %v1096, %v1102
        %v1107 = vmul.f32 %v1097, %v1103
        %v1108 = vadd.f32 %v1070, %v1106
        %v1109 = vadd.f32 %v1071, %v1107
        %1110 = vrot.lane.b32.xlu0 %v221, 78
        %v1111 = vpop.permute.xlu0 %1110
        %1112 = vrot.lane.b32.xlu0 %v222, 78
        %v1113 = vpop.permute.xlu0 %1112
        %vm1114 = vcmp.lt.s32.totalorder %v228, 78
        %v1115 = vsel %vm1114, %v1111, %v1113
        %v1116 = vsel %vm1114, %v1113, %v1111
        %s1117 = scalar_lea.vmem [#allocation2], 188
        %v1118 = vld [vmem:[%s1117] sm:$0xf]
        %1120 = vst [vmem:[#allocation1] ss:$4 sm:$0xff] %v1118
        %v1121 = vld.sshfl [vmem:[#allocation1] sm:$0xff pattern:$0x73625140]
        %v1122 = vld.sshfl [vmem:[#allocation1 + $0x8] sm:$0xff pattern:$0x73625140]
        %v1125 = vmul.f32 %v1115, %v1121
        %v1126 = vmul.f32 %v1116, %v1122
        %v1127 = vadd.f32 %v1089, %v1125
        %v1128 = vadd.f32 %v1090, %v1126
        %1129 = vrot.lane.b32.xlu0 %v221, 77
        %v1130 = vpop.permute.xlu0 %1129
        %1131 = vrot.lane.b32.xlu0 %v222, 77
        %v1132 = vpop.permute.xlu0 %1131
        %vm1133 = vcmp.lt.s32.totalorder %v228, 77
        %v1134 = vsel %vm1133, %v1130, %v1132
        %v1135 = vsel %vm1133, %v1132, %v1130
        %s1136 = scalar_lea.vmem [#allocation2], 192
        %v1137 = vld [vmem:[%s1136] sm:$0xf]
        %1139 = vst [vmem:[#allocation1] ss:$4 sm:$0xff] %v1137
        %v1140 = vld.sshfl [vmem:[#allocation1] sm:$0xff pattern:$0x73625140]
        %v1141 = vld.sshfl [vmem:[#allocation1 + $0x8] sm:$0xff pattern:$0x73625140]
        %v1144 = vmul.f32 %v1134, %v1140
        %v1145 = vmul.f32 %v1135, %v1141
        %v1146 = vadd.f32 %v1108, %v1144
        %v1147 = vadd.f32 %v1109, %v1145
        %v1148 = vadd.f32 %v1146, %v1127
        %v1149 = vadd.f32 %v1147, %v1128
        %v1152 = vrot.slane %v1148, 1
        %v1153 = vrot.slane %v1149, 1
        %v1156 = vadd.f32 %v1148, %v1152
        %v1157 = vadd.f32 %v1149, %v1153
        %v1158 = vxor.u32 %v1156, 2147483648
        %v1159 = vxor.u32 %v1157, 2147483648
        %v1160 = vmul.f32 %v1158, 1.442695
        %v1161 = vpow.pop %v1160
        %v1162 = vmul.f32 %v1159, 1.442695
        %v1163 = vpow.pop %v1162
        %v1164 = vadd.f32 %v1161, 1.0
        %v1165 = vadd.f32 %v1163, 1.0
        %v1166 = vrcp.pop %v1164
        %v1167 = vmul.f32 %v1164, %v1166
        %v1168 = vsub.f32 1.0, %v1167
        %v1169 = vmul.f32 %v1166, %v1168
        %v1170 = vadd.f32 %v1166, %v1169
        %vm1171 = vweird.f32 %v1164
        %vm1172 = vweird.f32 %v1166
        %vm1173 = vmor %vm1171, %vm1172
        %v1174 = vsel %vm1173, %v1166, %v1170
        %v1175 = vand.u32 2147483647, %v1164
        %vm1176 = vcmp.eq.f32.partialorder %v1175, 8.507059e+37
        %v1177 = vand.u32 %v1164, 2147483648
        %v1178 = vor.u32 1.1754944e-38, %v1177
        %v1179 = vsel %vm1176, %v1178, %v1174
        %v1180 = vmul.f32 1.0, %v1179
        %v1181 = vrcp.pop %v1165
        %v1182 = vmul.f32 %v1165, %v1181
        %v1183 = vsub.f32 1.0, %v1182
        %v1184 = vmul.f32 %v1181, %v1183
        %v1185 = vadd.f32 %v1181, %v1184
        %vm1186 = vweird.f32 %v1165
        %vm1187 = vweird.f32 %v1181
        %vm1188 = vmor %vm1186, %vm1187
        %v1189 = vsel %vm1188, %v1181, %v1185
        %v1190 = vand.u32 2147483647, %v1165
        %vm1191 = vcmp.eq.f32.partialorder %v1190, 8.507059e+37
        %v1192 = vand.u32 %v1165, 2147483648
        %v1193 = vor.u32 1.1754944e-38, %v1192
        %v1194 = vsel %vm1191, %v1193, %v1189
        %v1195 = vmul.f32 1.0, %v1194
        %v1196 = vperm.slane %v1180, 0
        %v1197 = vperm.slane %v1195, 0
        %v1200 = vrot.slane %v1197, 4
        %v1201 = vsel %vm186, %v1196, %v1200
        %v1203 = vmul.f32 %v179, %v1201
        %1204 = vst [vmem:[%s178] sm:$0xff] %v1203
        %s1205 = sand.u32 %s75, 1
        %s1206 = scalar_lea.sflag [#allocation4], %s1205
        %s1207 = sand.u32 %s75, 1
        %s1208 = smul.addr %s1207, 8
        %s1209 = scalar_lea.vmem [#allocation7], %s1208
        // Predicated region
        $region37: #{tpu_custom_call.1} parent=27 // pred_check
          %p1210 = pneg %p85
        $region38: #{tpu_custom_call.1} parent=27 // pred_check_branch
          %1212 = sbr.rel (%p1210) target = $region40
        $region39: #{tpu_custom_call.1} parent=27 // pred_region
          %1214 = vsyncadd %s1206, 0
          %s1215 = smul.addr %s20, 2
          %s1216 = smul.addr %s1215, 4
          %s1217 = scalar_lea.hbm %s2, %s1216
          %s1219 = sshll.u32 %s1209, 4
          %s1220 = int_to_ptr.vmem [resolvable:$true] %s1219
          %s1221 = sshll.u32 %s1217, 4
          %s1222 = int_to_ptr.hbm [resolvable:$true] %s1221
          %1224 = dma.vmem_to_hbm [thread:$0]  %s1220, 128, %s1222, %s1206
        $region40: #{tpu_custom_call.1} parent=27 // pred_fallthru
          _
      $region28: #{tpu_custom_call.1} parent=5 // pred_fallthru
        _
      %p1225 = scmp.le.s32.totalorder 2, %s15
      // Predicated region
      $region41: #{tpu_custom_call.1} parent=5 // pred_check
        %p1226 = pneg %p1225
      $region42: #{tpu_custom_call.1} parent=5 // pred_check_branch
        %1228 = sbr.rel (%p1226) target = $region44
      $region43: #{tpu_custom_call.1} parent=5 // pred_region
        %s1229 = ssub.s32 %s15, 2
        // Predicated region
        $region45: #{tpu_custom_call.1} parent=43 // pred_check
          %p1230 = pneg %p91
        $region46: #{tpu_custom_call.1} parent=43 // pred_check_branch
          %1232 = sbr.rel (%p1230) target = $region48
        $region47: #{tpu_custom_call.1} parent=43 // pred_region
          %s1233 = sand.u32 %s76, 1
          %s1234 = scalar_lea.sflag [#allocation4], %s1233
          %s1235 = sand.u32 %s76, 1
          %s1236 = smul.addr %s1235, 8
          %s1237 = scalar_lea.vmem [#allocation7], %s1236
          %1239 = dma.done %s1234, 128
        $region48: #{tpu_custom_call.1} parent=43 // pred_fallthru
          _
      $region44: #{tpu_custom_call.1} parent=5 // pred_fallthru
        _
    $region6: #{tpu_custom_call.1} parent=1 // loop_footer
      %s19 = sadd.s32 1, %s15
    $region7: #{tpu_custom_call.1} parent=1 // loop_footer_branch
      %14 = sbr.rel target = $region3
    $region8: #{tpu_custom_call.1} parent=1 // loop_exit
      _
    %1240 = vsyncpa [#allocation3], 1
    %s1241 = scalar_lea.sflag [#allocation3], 1
    %1242 = vsyncpa %s1241, 1
    %1243 = vsyncpa [#allocation6], 1
    %s1244 = scalar_lea.sflag [#allocation6], 1
    %1245 = vsyncpa %s1244, 1
    %1246 = vsyncpa [#allocation4], 1
    %s1247 = scalar_lea.sflag [#allocation4], 1
    %1248 = vsyncpa %s1247, 1

</llo_original>
